<compile_context>
chip_gen: v6e
topology: v6e:2x2x1
jax: 0.10.0
libtpu: 0.0.40
codegen_flags: <defaults>
</compile_context>

<pallas_src>
import jax
import jax.numpy as jnp
from jax import lax
from jax.experimental import pallas as pl
from jax.experimental.pallas import tpu as pltpu


def _round_up(x, m):
    return (x + m - 1) // m * m


def _tile_bytes(rows, cols, itemsize):
    """Physical VMEM bytes of a 2-D tile after sublane/lane padding."""
    sublane = 8 * (4 // itemsize)            # 8 rows for f32, 16 for bf16
    return _round_up(max(rows, 1), sublane) * _round_up(max(cols, 1), 128) * itemsize


def _footprint_bytes(C, C8, N_pad, TQ, store_attn, attn_itemsize):
    t = _tile_bytes
    fp = 0
    fp += 2 * t(C, N_pad, 4)                                   # x block (double-buffered)
    fp += 2 * t(C, TQ, 4)                                      # out block
    if store_attn:
        fp += 2 * t(TQ, N_pad, attn_itemsize)                  # attention strip
    fp += 2 * (2 * t(C8, C, 2) + t(C, C, 2))                   # wq, wk, wv (bf16)
    fp += 2 * (2 * t(C8, 1, 4) + t(C, 1, 4) + t(1, N_pad, 4))  # biases + key mask
    fp += 2 * t(C8, N_pad, 2) + t(C, N_pad, 2)                 # Q/K/V scratch (single)
    return fp


def _vmem_budget_bytes():
    try:
        cap = int(pltpu.get_tpu_info().vmem_capacity_bytes)
    except Exception:
        cap = 128 << 20
    # ~48 MiB on 64 MiB parts (v7x), ~96 MiB on 128 MiB parts (v5e/v6e).
    return max(min(cap - (16 << 20), 96 << 20), 32 << 20)


def _build_kernel(store_attn: bool, apply_kbias: bool):
    def kernel(gamma_ref,        # SMEM (1, 1) f32
               x_ref,            # VMEM (1, C, N_pad) f32   resident per batch element
               wq_ref, wk_ref,   # VMEM (C8, C) bf16
               wv_ref,           # VMEM (C, C) bf16
               bq_ref, bk_ref,   # VMEM (C8, 1) f32
               bv_ref,           # VMEM (C, 1) f32
               kbias_ref,        # VMEM (1, N_pad) f32   0 valid / -1e30 padded keys
               *rest):
        if store_attn:
            out_ref, attn_ref, q_s, k_s, v_s = rest
        else:
            out_ref, q_s, k_s, v_s = rest
            attn_ref = None

        qi = pl.program_id(1)
        tq = out_ref.shape[2]

        # ---- once per batch element: project Q/K/V over the full image ----
        # Wide (M, C) @ (C, N_pad) matmuls -> lane-dense channel-major scratch.
        @pl.when(qi == 0)
        def _project():
            xb = x_ref[0].astype(jnp.bfloat16)                                # (C, N_pad)
            q = jnp.dot(wq_ref[...], xb,
                        preferred_element_type=jnp.float32) + bq_ref[...]     # (C8, N_pad)
            k = jnp.dot(wk_ref[...], xb,
                        preferred_element_type=jnp.float32) + bk_ref[...]     # (C8, N_pad)
            v = jnp.dot(wv_ref[...], xb,
                        preferred_element_type=jnp.float32) + bv_ref[...]     # (C,  N_pad)
            q_s[...] = q.astype(jnp.bfloat16)
            k_s[...] = k.astype(jnp.bfloat16)
            v_s[...] = v.astype(jnp.bfloat16)

        # ---- per query tile ----
        row0 = pl.multiple_of(qi * tq, tq)
        q_tile = q_s[:, pl.ds(row0, tq)]                                      # (C8, TQ) bf16

        # energy[i, j] = sum_c q[c, row0+i] * k[c, j]   (lhs-transposed contraction)
        energy = lax.dot_general(q_tile, k_s[...],
                                 (((0,), (0,)), ((), ())),
                                 preferred_element_type=jnp.float32)          # (TQ, N_pad)
        if apply_kbias:
            energy = energy + kbias_ref[...]                                  # mask padded keys

        # numerically stable softmax over keys (lane axis)
        m = jnp.max(energy, axis=-1, keepdims=True)
        e = jnp.exp(energy - m)
        denom = jnp.sum(e, axis=-1, keepdims=True)
        attn = e * pl.reciprocal(denom, approx=True)                          # (TQ, N_pad) f32

        if store_attn:
            attn_ref[0] = attn.astype(attn_ref.dtype)

        # ctx[c, i] = sum_j v[c, j] * attn[i, j]   (contract last dims -> (C, TQ))
        ctx = lax.dot_general(v_s[...], attn.astype(jnp.bfloat16),
                              (((1,), (1,)), ((), ())),
                              preferred_element_type=jnp.float32)             # (C, TQ)

        x_tile = x_ref[0, :, pl.ds(row0, tq)]                                 # (C, TQ) f32
        out_ref[0] = (gamma_ref[0, 0] * ctx + x_tile).astype(out_ref.dtype)

    return kernel


def self_attn_forward(x_nchw, params, *, attn_dtype=jnp.bfloat16, return_attention=True):
    """x_nchw: (B, C, W, H) f32.  Returns (out (B,C,W,H) f32, attention (B,N,N) or None).

    attn_dtype=bf16 halves the dominant (B,N,N) HBM writeback; pass jnp.float32 to
    match the PyTorch output dtype exactly.  return_attention=False skips the
    attention output entirely (flash-style) when the caller discards it.
    """
    B, C, W, H = x_nchw.shape
    N = W * H
    C8 = C // 8
    assert C8 >= 1, "in_dim must be >= 8 (Conv2d out_channels = in_dim // 8)"

    N_pad = _round_up(N, 128)
    budget = _vmem_budget_bytes()
    attn_itemsize = jnp.dtype(attn_dtype).itemsize

    TQ = 128
    for cand in (512, 256, 128):
        if N_pad % cand == 0 and \
           _footprint_bytes(C, C8, N_pad, cand, return_attention, attn_itemsize) + (4 << 20) <= budget:
            TQ = cand
            break
    n_q_tiles = N_pad // TQ

    # glue: NCHW -> (B, C, N_pad).  Reshape + pad only, no transpose.
    x_pad = jnp.pad(x_nchw.reshape(B, C, N), ((0, 0), (0, 0), (0, N_pad - N)))

    wq_b = params["wq"].astype(jnp.bfloat16)                   # (C8, C)
    wk_b = params["wk"].astype(jnp.bfloat16)                   # (C8, C)
    wv_b = params["wv"].astype(jnp.bfloat16)                   # (C,  C)
    bq2 = params["bq"].reshape(C8, 1).astype(jnp.float32)
    bk2 = params["bk"].reshape(C8, 1).astype(jnp.float32)
    bv2 = params["bv"].reshape(C, 1).astype(jnp.float32)
    gamma2 = jnp.asarray(params["gamma"], jnp.float32).reshape(1, 1)
    kbias = jnp.where(jnp.arange(N_pad) < N, 0.0, -1e30).astype(jnp.float32).reshape(1, N_pad)

    kernel = _build_kernel(store_attn=return_attention, apply_kbias=(N_pad > N))

    in_specs = [
        pl.BlockSpec(memory_space=pltpu.MemorySpace.SMEM),         # gamma (1, 1)
        pl.BlockSpec((1, C, N_pad), lambda b, q: (b, 0, 0)),       # x, resident per b
        pl.BlockSpec((C8, C), lambda b, q: (0, 0)),                # wq
        pl.BlockSpec((C8, C), lambda b, q: (0, 0)),                # wk
        pl.BlockSpec((C, C), lambda b, q: (0, 0)),                 # wv
        pl.BlockSpec((C8, 1), lambda b, q: (0, 0)),                # bq
        pl.BlockSpec((C8, 1), lambda b, q: (0, 0)),                # bk
        pl.BlockSpec((C, 1), lambda b, q: (0, 0)),                 # bv
        pl.BlockSpec((1, N_pad), lambda b, q: (0, 0)),             # key padding bias
    ]

    out_shapes = [jax.ShapeDtypeStruct((B, C, N_pad), jnp.float32)]
    out_specs = [pl.BlockSpec((1, C, TQ), lambda b, q: (b, 0, q))]
    if return_attention:
        out_shapes.append(jax.ShapeDtypeStruct((B, N_pad, N_pad), attn_dtype))
        out_specs.append(pl.BlockSpec((1, TQ, N_pad), lambda b, q: (b, q, 0)))

    scratch_shapes = [
        pltpu.VMEM((C8, N_pad), jnp.bfloat16),                     # Q (channel-major, lane-dense)
        pltpu.VMEM((C8, N_pad), jnp.bfloat16),                     # K
        pltpu.VMEM((C, N_pad), jnp.bfloat16),                      # V
    ]

    grid_spec = pltpu.PrefetchScalarGridSpec(
        num_scalar_prefetch=0,
        grid=(B, n_q_tiles),
        in_specs=in_specs,
        out_specs=tuple(out_specs),
        scratch_shapes=scratch_shapes,
    )

    results = pl.pallas_call(
        kernel,
        out_shape=tuple(out_shapes),
        grid_spec=grid_spec,
        compiler_params=pltpu.CompilerParams(
            # q-axis is "arbitrary": Q/K/V scratch is filled at q==0 and reused later.
            dimension_semantics=("parallel", "arbitrary"),
            vmem_limit_bytes=budget),
    )(gamma2, x_pad, wq_b, wk_b, wv_b, bq2, bk2, bv2, kbias)

    out = results[0][:, :, :N].reshape(B, C, W, H)
    if return_attention:
        return out, results[1][:, :N, :N]
    return out, None


def _reference(x_nchw, params):
    """Pure-JAX (f32) reference mirroring the PyTorch forward."""
    B, C, W, H = x_nchw.shape
    N = W * H
    xf = x_nchw.reshape(B, C, N)                                         # (B, C, N)
    q = jnp.einsum('oc,bcn->bon', params["wq"], xf) + params["bq"][None, :, None]
    k = jnp.einsum('oc,bcn->bon', params["wk"], xf) + params["bk"][None, :, None]
    v = jnp.einsum('oc,bcn->bon', params["wv"], xf) + params["bv"][None, :, None]
    proj_query = jnp.transpose(q, (0, 2, 1))                             # (B, N, C8)
    energy = jnp.einsum('bic,bcj->bij', proj_query, k)                   # (B, N, N)
    attention = jax.nn.softmax(energy, axis=-1)
    out = jnp.einsum('bcm,bnm->bcn', v, attention)                       # (B, C, N)
    out = out.reshape(B, C, W, H)
    out = params["gamma"] * out + x_nchw
    return out, attention


def init_params(key, in_dim):
    c8 = in_dim // 8
    k1, k2, k3 = jax.random.split(key, 3)
    return {
        "wq": 0.1 * jax.random.normal(k1, (c8, in_dim), jnp.float32),
        "bq": jnp.zeros((c8,), jnp.float32),
        "wk": 0.1 * jax.random.normal(k2, (c8, in_dim), jnp.float32),
        "bk": jnp.zeros((c8,), jnp.float32),
        "wv": 0.1 * jax.random.normal(k3, (in_dim, in_dim), jnp.float32),
        "bv": jnp.zeros((in_dim,), jnp.float32),
        "gamma": jnp.float32(0.0),     # matches nn.Parameter(torch.zeros(1))
    }


def _check(B, C, W, H, key):
    kx, kp = jax.random.split(key)
    x = jax.random.normal(kx, (B, C, W, H), jnp.float32)
    params = init_params(kp, C)
    # non-zero gamma so the attention/value path actually contributes to `out`
    params["gamma"] = jnp.float32(0.75)

    out, attn = self_attn_forward(x, params)
    out = jax.block_until_ready(out)
    attn = jax.block_until_ready(attn)

    out_ref, attn_ref = _reference(x, params)
    N = W * H
    assert out.shape == (B, C, W, H) and attn.shape == (B, N, N)
    # bf16 MXU operands + bf16 attention output + approx reciprocal -> relaxed tolerances
    assert jnp.allclose(attn.astype(jnp.float32), attn_ref, atol=3e-2, rtol=0.0), "attention mismatch"
    assert jnp.allclose(out, out_ref, atol=5e-2, rtol=5e-2), "output mismatch"

    # flash-style path (attention output skipped) must still match `out`
    out2, none_attn = self_attn_forward(x, params, return_attention=False)
    out2 = jax.block_until_ready(out2)
    assert none_attn is None
    assert jnp.allclose(out2, out_ref, atol=5e-2, rtol=5e-2), "no-attention output mismatch"


if __name__ == "__main__":
    key = jax.random.PRNGKey(0)
    k1, k2 = jax.random.split(key)
    # primary case: N = 256 (multiple of 128, no key padding needed)
    _check(B=2, C=64, W=16, H=16, key=k1)
    # padding / key-mask path: N = 64 -> padded to 128
    _check(B=2, C=64, W=8, H=8, key=k2)
    print("KERNEL_OK")
</pallas_src>

<mosaic_0001>
module attributes {stable_mosaic.version = 11 : i64} {
  func.func @kernel(%arg0: i32, %arg1: i32, %arg2: memref<1x1xf32, #tpu.memory_space<smem>>, %arg3: memref<1x64x256xf32, #tpu.memory_space<vmem>>, %arg4: memref<8x64xbf16, #tpu.memory_space<vmem>>, %arg5: memref<8x64xbf16, #tpu.memory_space<vmem>>, %arg6: memref<64x64xbf16, #tpu.memory_space<vmem>>, %arg7: memref<8x1xf32, #tpu.memory_space<vmem>>, %arg8: memref<8x1xf32, #tpu.memory_space<vmem>>, %arg9: memref<64x1xf32, #tpu.memory_space<vmem>>, %arg10: memref<1x256xf32, #tpu.memory_space<vmem>>, %arg11: memref<1x64x256xf32, #tpu.memory_space<vmem>>, %arg12: memref<1x256x256xbf16, #tpu.memory_space<vmem>>, %arg13: memref<8x256xbf16, #tpu.memory_space<vmem>>, %arg14: memref<8x256xbf16, #tpu.memory_space<vmem>>, %arg15: memref<64x256xbf16, #tpu.memory_space<vmem>>) attributes {dimension_semantics = [#tpu.dimension_semantics<parallel>, #tpu.dimension_semantics<arbitrary>], iteration_bounds = array<i64: 2, 1>, scalar_prefetch = 0 : i64, scratch_operands = 3 : i64, tpu.core_type = #tpu.core_type<tc>, window_params = [{transform_indices = @transform_0, window_bounds = array<i64: 1, 1>}, {transform_indices = @transform_1, window_bounds = array<i64: 1, 64, 256>}, {pipeline_mode = #tpu.pipeline_mode<synchronous>, transform_indices = @transform_2, window_bounds = array<i64: 8, 64>}, {pipeline_mode = #tpu.pipeline_mode<synchronous>, transform_indices = @transform_3, window_bounds = array<i64: 8, 64>}, {pipeline_mode = #tpu.pipeline_mode<synchronous>, transform_indices = @transform_4, window_bounds = array<i64: 64, 64>}, {pipeline_mode = #tpu.pipeline_mode<synchronous>, transform_indices = @transform_5, window_bounds = array<i64: 8, 1>}, {pipeline_mode = #tpu.pipeline_mode<synchronous>, transform_indices = @transform_6, window_bounds = array<i64: 8, 1>}, {pipeline_mode = #tpu.pipeline_mode<synchronous>, transform_indices = @transform_7, window_bounds = array<i64: 64, 1>}, {pipeline_mode = #tpu.pipeline_mode<synchronous>, transform_indices = @transform_8, window_bounds = array<i64: 1, 256>}, {transform_indices = @transform_9, window_bounds = array<i64: 1, 64, 256>}, {transform_indices = @transform_10, window_bounds = array<i64: 1, 256, 256>}]} {
    %c0_i32 = arith.constant 0 : i32
    %0 = arith.cmpi eq, %arg1, %c0_i32 : i32
    %1 = arith.extui %0 : i1 to i32
    %c0_i32_0 = arith.constant 0 : i32
    %2 = arith.cmpi ne, %1, %c0_i32_0 : i32
    scf.if %2 {
      %c0_18 = arith.constant 0 : index
      %c0_19 = arith.constant 0 : index
      %c0_20 = arith.constant 0 : index
      %36 = vector.load %arg3[%c0_18, %c0_19, %c0_20] : memref<1x64x256xf32, #tpu.memory_space<vmem>>, vector<1x64x256xf32>
      %37 = vector.shape_cast %36 : vector<1x64x256xf32> to vector<64x256xf32>
      %38 = arith.truncf %37 : vector<64x256xf32> to vector<64x256xbf16>
      %c0_21 = arith.constant 0 : index
      %c0_22 = arith.constant 0 : index
      %39 = vector.load %arg4[%c0_21, %c0_22] : memref<8x64xbf16, #tpu.memory_space<vmem>>, vector<8x64xbf16>
      %cst_23 = arith.constant dense<0.000000e+00> : vector<8x256xf32>
      %40 = tpu.matmul %39, %38, %cst_23 {dimension_numbers = #tpu.dot_dimension_numbers<[1], [0], [0], [1], [0, 0, 1, 1], [], []>} : vector<8x64xbf16>, vector<64x256xbf16>, vector<8x256xf32> -> vector<8x256xf32>
      %c0_24 = arith.constant 0 : index
      %c0_25 = arith.constant 0 : index
      %41 = vector.load %arg7[%c0_24, %c0_25] : memref<8x1xf32, #tpu.memory_space<vmem>>, vector<8x1xf32>
      %42 = vector.broadcast %41 : vector<8x1xf32> to vector<8x256xf32>
      %43 = arith.addf %40, %42 : vector<8x256xf32>
      %c0_26 = arith.constant 0 : index
      %c0_27 = arith.constant 0 : index
      %44 = vector.load %arg5[%c0_26, %c0_27] : memref<8x64xbf16, #tpu.memory_space<vmem>>, vector<8x64xbf16>
      %cst_28 = arith.constant dense<0.000000e+00> : vector<8x256xf32>
      %45 = tpu.matmul %44, %38, %cst_28 {dimension_numbers = #tpu.dot_dimension_numbers<[1], [0], [0], [1], [0, 0, 1, 1], [], []>} : vector<8x64xbf16>, vector<64x256xbf16>, vector<8x256xf32> -> vector<8x256xf32>
      %c0_29 = arith.constant 0 : index
      %c0_30 = arith.constant 0 : index
      %46 = vector.load %arg8[%c0_29, %c0_30] : memref<8x1xf32, #tpu.memory_space<vmem>>, vector<8x1xf32>
      %47 = vector.broadcast %46 : vector<8x1xf32> to vector<8x256xf32>
      %48 = arith.addf %45, %47 : vector<8x256xf32>
      %c0_31 = arith.constant 0 : index
      %c0_32 = arith.constant 0 : index
      %49 = vector.load %arg6[%c0_31, %c0_32] : memref<64x64xbf16, #tpu.memory_space<vmem>>, vector<64x64xbf16>
      %cst_33 = arith.constant dense<0.000000e+00> : vector<64x256xf32>
      %50 = tpu.matmul %49, %38, %cst_33 {dimension_numbers = #tpu.dot_dimension_numbers<[1], [0], [0], [1], [0, 0, 1, 1], [], []>} : vector<64x64xbf16>, vector<64x256xbf16>, vector<64x256xf32> -> vector<64x256xf32>
      %c0_34 = arith.constant 0 : index
      %c0_35 = arith.constant 0 : index
      %51 = vector.load %arg9[%c0_34, %c0_35] : memref<64x1xf32, #tpu.memory_space<vmem>>, vector<64x1xf32>
      %52 = vector.broadcast %51 : vector<64x1xf32> to vector<64x256xf32>
      %53 = arith.addf %50, %52 : vector<64x256xf32>
      %54 = arith.truncf %43 : vector<8x256xf32> to vector<8x256xbf16>
      %c0_36 = arith.constant 0 : index
      %c0_37 = arith.constant 0 : index
      %55 = vector.load %arg13[%c0_36, %c0_37] : memref<8x256xbf16, #tpu.memory_space<vmem>>, vector<8x256xbf16>
      tpu.vector_store %arg13[%c0_36, %c0_37], %54 {strides = array<i32>} : memref<8x256xbf16, #tpu.memory_space<vmem>>, vector<8x256xbf16>,
      %56 = arith.truncf %48 : vector<8x256xf32> to vector<8x256xbf16>
      %c0_38 = arith.constant 0 : index
      %c0_39 = arith.constant 0 : index
      %57 = vector.load %arg14[%c0_38, %c0_39] : memref<8x256xbf16, #tpu.memory_space<vmem>>, vector<8x256xbf16>
      tpu.vector_store %arg14[%c0_38, %c0_39], %56 {strides = array<i32>} : memref<8x256xbf16, #tpu.memory_space<vmem>>, vector<8x256xbf16>,
      %58 = arith.truncf %53 : vector<64x256xf32> to vector<64x256xbf16>
      %c0_40 = arith.constant 0 : index
      %c0_41 = arith.constant 0 : index
      %59 = vector.load %arg15[%c0_40, %c0_41] : memref<64x256xbf16, #tpu.memory_space<vmem>>, vector<64x256xbf16>
      tpu.vector_store %arg15[%c0_40, %c0_41], %58 {strides = array<i32>} : memref<64x256xbf16, #tpu.memory_space<vmem>>, vector<64x256xbf16>,
    } else {
    }
    %c256_i32 = arith.constant 256 : i32
    %3 = arith.muli %arg1, %c256_i32 : i32
    %4 = tpu.assume_multiple %3, 256 : i32
    %c0 = arith.constant 0 : index
    %5 = arith.index_cast %4 : i32 to index
    %6 = vector.load %arg13[%c0, %5] : memref<8x256xbf16, #tpu.memory_space<vmem>>, vector<8x256xbf16>
    %c0_1 = arith.constant 0 : index
    %c0_2 = arith.constant 0 : index
    %7 = vector.load %arg14[%c0_1, %c0_2] : memref<8x256xbf16, #tpu.memory_space<vmem>>, vector<8x256xbf16>
    %cst = arith.constant dense<0.000000e+00> : vector<256x256xf32>
    %8 = tpu.matmul %6, %7, %cst {dimension_numbers = #tpu.dot_dimension_numbers<[0], [0], [1], [1], [0, 1, 1, 1], [], []>} : vector<8x256xbf16>, vector<8x256xbf16>, vector<256x256xf32> -> vector<256x256xf32>
    %cst_3 = arith.constant dense<0xFF800000> : vector<256xf32>
    %9 = vector.multi_reduction <maximumf>, %8, %cst_3 [1] : vector<256x256xf32> to vector<256xf32>
    %10 = vector.shape_cast %9 : vector<256xf32> to vector<256x1xf32>
    %11 = vector.broadcast %10 : vector<256x1xf32> to vector<256x256xf32>
    %12 = arith.subf %8, %11 : vector<256x256xf32>
    %13 = math.exp %12 : vector<256x256xf32>
    %cst_4 = arith.constant dense<0.000000e+00> : vector<256xf32>
    %14 = vector.multi_reduction <add>, %13, %cst_4 [1] : vector<256x256xf32> to vector<256xf32>
    %15 = vector.shape_cast %14 : vector<256xf32> to vector<256x1xf32>
    %16 = tpu.reciprocal %15 {approx = true} : vector<256x1xf32> -> vector<256x1xf32>
    %17 = vector.broadcast %16 : vector<256x1xf32> to vector<256x256xf32>
    %18 = arith.mulf %13, %17 : vector<256x256xf32>
    %19 = arith.truncf %18 : vector<256x256xf32> to vector<256x256xbf16>
    %c0_5 = arith.constant 0 : index
    %c0_6 = arith.constant 0 : index
    %c0_7 = arith.constant 0 : index
    %20 = vector.load %arg12[%c0_5, %c0_6, %c0_7] : memref<1x256x256xbf16, #tpu.memory_space<vmem>>, vector<1x256x256xbf16>
    %21 = vector.shape_cast %20 : vector<1x256x256xbf16> to vector<256x256xbf16>
    %22 = vector.shape_cast %19 : vector<256x256xbf16> to vector<1x256x256xbf16>
    tpu.vector_store %arg12[%c0_5, %c0_6, %c0_7], %22 {strides = array<i32>} : memref<1x256x256xbf16, #tpu.memory_space<vmem>>, vector<1x256x256xbf16>,
    %c0_8 = arith.constant 0 : index
    %c0_9 = arith.constant 0 : index
    %23 = vector.load %arg15[%c0_8, %c0_9] : memref<64x256xbf16, #tpu.memory_space<vmem>>, vector<64x256xbf16>
    %24 = arith.truncf %18 : vector<256x256xf32> to vector<256x256xbf16>
    %cst_10 = arith.constant dense<0.000000e+00> : vector<64x256xf32>
    %25 = tpu.matmul %23, %24, %cst_10 {dimension_numbers = #tpu.dot_dimension_numbers<[1], [1], [0], [0], [0, 0, 1, 0], [], []>} : vector<64x256xbf16>, vector<256x256xbf16>, vector<64x256xf32> -> vector<64x256xf32>
    %c0_11 = arith.constant 0 : index
    %c0_12 = arith.constant 0 : index
    %26 = arith.index_cast %4 : i32 to index
    %27 = vector.load %arg3[%c0_11, %c0_12, %26] : memref<1x64x256xf32, #tpu.memory_space<vmem>>, vector<1x64x256xf32>
    %28 = vector.shape_cast %27 : vector<1x64x256xf32> to vector<64x256xf32>
    %c0_13 = arith.constant 0 : index
    %c0_14 = arith.constant 0 : index
    %29 = memref.load %arg2[%c0_13, %c0_14] : memref<1x1xf32, #tpu.memory_space<smem>>
    %30 = vector.broadcast %29 : f32 to vector<64x256xf32>
    %31 = arith.mulf %30, %25 : vector<64x256xf32>
    %32 = arith.addf %31, %28 : vector<64x256xf32>
    %c0_15 = arith.constant 0 : index
    %c0_16 = arith.constant 0 : index
    %c0_17 = arith.constant 0 : index
    %33 = vector.load %arg11[%c0_15, %c0_16, %c0_17] : memref<1x64x256xf32, #tpu.memory_space<vmem>>, vector<1x64x256xf32>
    %34 = vector.shape_cast %33 : vector<1x64x256xf32> to vector<64x256xf32>
    %35 = vector.shape_cast %32 : vector<64x256xf32> to vector<1x64x256xf32>
    tpu.vector_store %arg11[%c0_15, %c0_16, %c0_17], %35 {strides = array<i32>} : memref<1x64x256xf32, #tpu.memory_space<vmem>>, vector<1x64x256xf32>,
    return
  }
  func.func @transform_0(%arg0: i32, %arg1: i32) -> (i32, i32) {
    %c0_i32 = arith.constant 0 : i32
    %c0_i32_0 = arith.constant 0 : i32
    %c0_i32_1 = arith.constant 0 : i32
    return %c0_i32, %c0_i32_0 : i32, i32
  }
  func.func @transform_1(%arg0: i32, %arg1: i32) -> (i32, i32, i32) {
    %c0_i32 = arith.constant 0 : i32
    %c0_i32_0 = arith.constant 0 : i32
    %c0_i32_1 = arith.constant 0 : i32
    return %arg0, %c0_i32, %c0_i32_0 : i32, i32, i32
  }
  func.func @transform_2(%arg0: i32, %arg1: i32) -> (i32, i32) {
    %c0_i32 = arith.constant 0 : i32
    %c0_i32_0 = arith.constant 0 : i32
    %c0_i32_1 = arith.constant 0 : i32
    return %c0_i32, %c0_i32_0 : i32, i32
  }
  func.func @transform_3(%arg0: i32, %arg1: i32) -> (i32, i32) {
    %c0_i32 = arith.constant 0 : i32
    %c0_i32_0 = arith.constant 0 : i32
    %c0_i32_1 = arith.constant 0 : i32
    return %c0_i32, %c0_i32_0 : i32, i32
  }
  func.func @transform_4(%arg0: i32, %arg1: i32) -> (i32, i32) {
    %c0_i32 = arith.constant 0 : i32
    %c0_i32_0 = arith.constant 0 : i32
    %c0_i32_1 = arith.constant 0 : i32
    return %c0_i32, %c0_i32_0 : i32, i32
  }
  func.func @transform_5(%arg0: i32, %arg1: i32) -> (i32, i32) {
    %c0_i32 = arith.constant 0 : i32
    %c0_i32_0 = arith.constant 0 : i32
    %c0_i32_1 = arith.constant 0 : i32
    return %c0_i32, %c0_i32_0 : i32, i32
  }
  func.func @transform_6(%arg0: i32, %arg1: i32) -> (i32, i32) {
    %c0_i32 = arith.constant 0 : i32
    %c0_i32_0 = arith.constant 0 : i32
    %c0_i32_1 = arith.constant 0 : i32
    return %c0_i32, %c0_i32_0 : i32, i32
  }
  func.func @transform_7(%arg0: i32, %arg1: i32) -> (i32, i32) {
    %c0_i32 = arith.constant 0 : i32
    %c0_i32_0 = arith.constant 0 : i32
    %c0_i32_1 = arith.constant 0 : i32
    return %c0_i32, %c0_i32_0 : i32, i32
  }
  func.func @transform_8(%arg0: i32, %arg1: i32) -> (i32, i32) {
    %c0_i32 = arith.constant 0 : i32
    %c0_i32_0 = arith.constant 0 : i32
    %c0_i32_1 = arith.constant 0 : i32
    return %c0_i32, %c0_i32_0 : i32, i32
  }
  func.func @transform_9(%arg0: i32, %arg1: i32) -> (i32, i32, i32) {
    %c0_i32 = arith.constant 0 : i32
    %c0_i32_0 = arith.constant 0 : i32
    return %arg0, %c0_i32, %arg1 : i32, i32, i32
  }
  func.func @transform_10(%arg0: i32, %arg1: i32) -> (i32, i32, i32) {
    %c0_i32 = arith.constant 0 : i32
    %c0_i32_0 = arith.constant 0 : i32
    return %arg0, %arg1, %c0_i32 : i32, i32, i32
  }
}

</mosaic_0001>

<llo_original>
// kernel: tpu_custom_call.1
$region0: #{tpu_custom_call.1}
  #allocation0 [shape = 'u32[]', space=smem, size = 0x4, offset = 0x4, fixed_abs, tag = 'smem constant byte address 0x4 - core index']
  #allocation1 [shape = 'u32[144,128]{1,0:T(1,128)}', space=vmem, size = 0x12000, scoped, tag = 'internal scratch']
  #allocation2 [shape = 'bf16[8,256]{1,0:T(8,128)(2,1)}', space=vmem, size = 0x1000, scoped, tag = 'scratch operand']
  #allocation3 [shape = 'bf16[8,256]{1,0:T(8,128)(2,1)}', space=vmem, size = 0x1000, scoped, tag = 'scratch operand']
  #allocation4 [shape = 'bf16[64,256]{1,0:T(8,128)(2,1)}', space=vmem, size = 0x8000, scoped, tag = 'scratch operand']
  #allocation5 [shape = 'f32[1,1]{1,0:T(1,128)S(6)}', space=smem, size = 0x200, scoped, tag = 'scoped memory for tpu_custom_call.1']
  %s0 = inlined_call_operand.<no memory space> [shape: f32[1,1], index: 0, kind: input, shape index: {}]
  %s1 = inlined_call_operand.hbm [shape: f32[2,64,256], index: 1, kind: input, shape index: {}]
  %s2 = inlined_call_operand.vmem [shape: bf16[8,64], index: 2, kind: input, shape index: {}]
  %s3 = inlined_call_operand.vmem [shape: bf16[8,64], index: 3, kind: input, shape index: {}]
  %s4 = inlined_call_operand.vmem [shape: bf16[64,64], index: 4, kind: input, shape index: {}]
  %s5 = inlined_call_operand.vmem [shape: f32[8,1], index: 5, kind: input, shape index: {}]
  %s6 = inlined_call_operand.vmem [shape: f32[8,1], index: 6, kind: input, shape index: {}]
  %s7 = inlined_call_operand.vmem [shape: f32[64,1], index: 7, kind: input, shape index: {}]
  %s8 = inlined_call_operand.vmem [shape: f32[1,256], index: 8, kind: input, shape index: {}]
  %s9 = inlined_call_operand.hbm [shape: f32[2,64,256], index: 9, kind: output, shape index: {0}]
  %s10 = inlined_call_operand.hbm [shape: bf16[2,256,256], index: 10, kind: output, shape index: {1}]
  %11 = xla_tuple %s9, %s10
  %s12 = sld [smem:[#allocation0]]
  $region85: #{tpu_custom_call.1} parent=0
    _
  %s14 = ssub.s32 1, %s12
  %s15 = scalar_select 0, %s14, %s12
  %16 = sst [smem:[#allocation5]] %s0
  $region1: #{tpu_custom_call.1} parent=0
    #allocation6 [shape = 'u8[131072]{0}', space=vmem, size = 0x20000, scoped, tag = 'input window, operand 1']
    #allocation7 [shape = 's32[2]{0}', space=sflag, size = 0x8, scoped, tag = 'scoped memory for tpu_custom_call.1']
    #allocation8 [shape = 's32[2]{0}', space=sflag, size = 0x8, scoped, tag = 'scoped memory for tpu_custom_call.1']
    #allocation9 [shape = 'u8[131072]{0}', space=vmem, size = 0x20000, scoped, tag = 'output window, operand 0']
    #allocation10 [shape = 'u8[262144]{0}', space=vmem, size = 0x40000, scoped, tag = 'output window, operand 1']
    #allocation11 [shape = 's32[2]{0}', space=sflag, size = 0x8, scoped, tag = 'scoped memory for tpu_custom_call.1']
    %17 = vsyncpa [#allocation7], 0
    %s18 = scalar_lea.sflag [#allocation7], 1
    %19 = vsyncpa %s18, 0
    %20 = vsyncpa [#allocation8], 0
    %s21 = scalar_lea.sflag [#allocation8], 1
    %22 = vsyncpa %s21, 0
    %23 = vsyncpa [#allocation11], 0
    %s24 = scalar_lea.sflag [#allocation11], 1
    %25 = vsyncpa %s24, 0
    loop: start=0, step=1, limit=4
    $region2: #{tpu_custom_call.1} parent=1 // loop_pre_header
      _
    $region3: #{tpu_custom_call.1} parent=1 // loop_header
      %s27 = sphi 0, %s31
      %p28 = scmp.ge.s32.totalorder %s27, 4
      %s34 = sphi 0, %s46
      %s35 = sphi 0, %s42
      %s36 = sphi 0, %s34
      %s37 = sphi 0, %s35
      %s38 = sphi 0, %s36
      %s39 = sphi 0, %s37
      %s47 = sphi 0, %s47
      %s49 = sphi 0, %s47
      %s50 = sphi 0, %s49
      %s64 = sphi 0, %s50
      %s70 = sphi 0, %s72
      %s73 = sphi 0, %s70
      %s74 = sphi 0, %s73
      %s90 = sphi 0, %s74
      %s94 = sphi 0, %s94
      %s96 = sphi 0, %s94
      %s97 = sphi 0, %s96
      %s111 = sphi 0, %s97
      %s115 = sphi 0, %s115
      %s117 = sphi 0, %s115
      %s118 = sphi 0, %s117
      %s132 = sphi 0, %s118
      %s136 = sphi 0, %s136
      %s138 = sphi 0, %s136
      %s139 = sphi 0, %s138
      %s153 = sphi 0, %s139
      %s157 = sphi 0, %s157
      %s159 = sphi 0, %s157
      %s160 = sphi 0, %s159
      %s174 = sphi 0, %s160
      %s178 = sphi 0, %s178
      %s180 = sphi 0, %s178
      %s181 = sphi 0, %s180
      %s195 = sphi 0, %s181
      %s199 = sphi 0, %s199
      %s201 = sphi 0, %s199
      %s202 = sphi 0, %s201
      %s216 = sphi 0, %s202
      %s220 = sphi 0, %s220
      %s222 = sphi 0, %s220
      %s223 = sphi 0, %s222
      %s237 = sphi 0, %s223
      %s245 = sphi 0, %s247
      %s248 = sphi 0, %s245
      %s249 = sphi 0, %s248
      %s265 = sphi 0, %s249
      %s273 = sphi 0, %s275
      %s276 = sphi 0, %s273
      %s277 = sphi 0, %s276
      %s293 = sphi 0, %s277
    $region4: #{tpu_custom_call.1} parent=1 // loop_header_branch
      %30 = sbr.rel (%p28) target = $region8
    $region5: #{tpu_custom_call.1} parent=1 // loop_body
      %s32 = ssub.s32 %s27, 1
      %s33 = ssub.s32 %s27, 2
      %s40 = sadd.s32 1, %s35
      %p41 = scmp.ge.s32.totalorder %s40, 1
      %s42 = scalar_select %p41, 0, %s40
      %s43 = sadd.s32 1, %s34
      %s44 = scalar_select %p41, %s43, %s34
      %p45 = scmp.ge.s32.totalorder %s44, 2
      %s46 = scalar_select %p45, 0, %s44
      %s48 = sadd.s32 %s47, 1
      %p51 = scmp.eq.s32.totalorder %s27, 1
      %p52 = scmp.ne.s32.totalorder %s47, %s49
      %p53 = scmp.eq.s32.totalorder %s27, 0
      %p54 = por %p52, %p53
      %p55 = scmp.ne.s32.totalorder %s47, %s49
      %p56 = scmp.eq.s32.totalorder %s32, 1
      %p57 = por %p55, %p56
      %p58 = scmp.ne.s32.totalorder %s49, %s50
      %p59 = scmp.eq.s32.totalorder %s32, 0
      %p60 = por %p58, %p59
      %p61 = scmp.ne.s32.totalorder %s49, %s50
      %p62 = scmp.eq.s32.totalorder %s33, 1
      %p63 = por %p61, %p62
      %p65 = scmp.ne.s32.totalorder %s50, %s64
      %p66 = scmp.eq.s32.totalorder %s33, 0
      %p67 = por %p65, %p66
      %s68 = ssub.s32 %s34, %s46
      %p69 = scmp.eq.s32.totalorder %s68, 0
      %s71 = sadd.s32 %s70, 1
      %s72 = scalar_select %p69, %s70, %s71
      %p75 = pneg %p69
      %p76 = scmp.eq.s32.totalorder %s27, 1
      %p77 = por %p75, %p76
      %p78 = scmp.ne.s32.totalorder %s70, %s73
      %p79 = scmp.eq.s32.totalorder %s27, 0
      %p80 = por %p78, %p79
      %p81 = scmp.ne.s32.totalorder %s70, %s73
      %p82 = scmp.eq.s32.totalorder %s32, 1
      %p83 = por %p81, %p82
      %p84 = scmp.ne.s32.totalorder %s73, %s74
      %p85 = scmp.eq.s32.totalorder %s32, 0
      %p86 = por %p84, %p85
      %p87 = scmp.ne.s32.totalorder %s73, %s74
      %p88 = scmp.eq.s32.totalorder %s33, 1
      %p89 = por %p87, %p88
      %p91 = scmp.ne.s32.totalorder %s74, %s90
      %p92 = scmp.eq.s32.totalorder %s33, 0
      %p93 = por %p91, %p92
      %s95 = sadd.s32 %s94, 1
      %p98 = scmp.eq.s32.totalorder %s27, 1
      %p99 = scmp.ne.s32.totalorder %s94, %s96
      %p100 = scmp.eq.s32.totalorder %s27, 0
      %p101 = por %p99, %p100
      %p102 = scmp.ne.s32.totalorder %s94, %s96
      %p103 = scmp.eq.s32.totalorder %s32, 1
      %p104 = por %p102, %p103
      %p105 = scmp.ne.s32.totalorder %s96, %s97
      %p106 = scmp.eq.s32.totalorder %s32, 0
      %p107 = por %p105, %p106
      %p108 = scmp.ne.s32.totalorder %s96, %s97
      %p109 = scmp.eq.s32.totalorder %s33, 1
      %p110 = por %p108, %p109
      %p112 = scmp.ne.s32.totalorder %s97, %s111
      %p113 = scmp.eq.s32.totalorder %s33, 0
      %p114 = por %p112, %p113
      %s116 = sadd.s32 %s115, 1
      %p119 = scmp.eq.s32.totalorder %s27, 1
      %p120 = scmp.ne.s32.totalorder %s115, %s117
      %p121 = scmp.eq.s32.totalorder %s27, 0
      %p122 = por %p120, %p121
      %p123 = scmp.ne.s32.totalorder %s115, %s117
      %p124 = scmp.eq.s32.totalorder %s32, 1
      %p125 = por %p123, %p124
      %p126 = scmp.ne.s32.totalorder %s117, %s118
      %p127 = scmp.eq.s32.totalorder %s32, 0
      %p128 = por %p126, %p127
      %p129 = scmp.ne.s32.totalorder %s117, %s118
      %p130 = scmp.eq.s32.totalorder %s33, 1
      %p131 = por %p129, %p130
      %p133 = scmp.ne.s32.totalorder %s118, %s132
      %p134 = scmp.eq.s32.totalorder %s33, 0
      %p135 = por %p133, %p134
      %s137 = sadd.s32 %s136, 1
      %p140 = scmp.eq.s32.totalorder %s27, 1
      %p141 = scmp.ne.s32.totalorder %s136, %s138
      %p142 = scmp.eq.s32.totalorder %s27, 0
      %p143 = por %p141, %p142
      %p144 = scmp.ne.s32.totalorder %s136, %s138
      %p145 = scmp.eq.s32.totalorder %s32, 1
      %p146 = por %p144, %p145
      %p147 = scmp.ne.s32.totalorder %s138, %s139
      %p148 = scmp.eq.s32.totalorder %s32, 0
      %p149 = por %p147, %p148
      %p150 = scmp.ne.s32.totalorder %s138, %s139
      %p151 = scmp.eq.s32.totalorder %s33, 1
      %p152 = por %p150, %p151
      %p154 = scmp.ne.s32.totalorder %s139, %s153
      %p155 = scmp.eq.s32.totalorder %s33, 0
      %p156 = por %p154, %p155
      %s158 = sadd.s32 %s157, 1
      %p161 = scmp.eq.s32.totalorder %s27, 1
      %p162 = scmp.ne.s32.totalorder %s157, %s159
      %p163 = scmp.eq.s32.totalorder %s27, 0
      %p164 = por %p162, %p163
      %p165 = scmp.ne.s32.totalorder %s157, %s159
      %p166 = scmp.eq.s32.totalorder %s32, 1
      %p167 = por %p165, %p166
      %p168 = scmp.ne.s32.totalorder %s159, %s160
      %p169 = scmp.eq.s32.totalorder %s32, 0
      %p170 = por %p168, %p169
      %p171 = scmp.ne.s32.totalorder %s159, %s160
      %p172 = scmp.eq.s32.totalorder %s33, 1
      %p173 = por %p171, %p172
      %p175 = scmp.ne.s32.totalorder %s160, %s174
      %p176 = scmp.eq.s32.totalorder %s33, 0
      %p177 = por %p175, %p176
      %s179 = sadd.s32 %s178, 1
      %p182 = scmp.eq.s32.totalorder %s27, 1
      %p183 = scmp.ne.s32.totalorder %s178, %s180
      %p184 = scmp.eq.s32.totalorder %s27, 0
      %p185 = por %p183, %p184
      %p186 = scmp.ne.s32.totalorder %s178, %s180
      %p187 = scmp.eq.s32.totalorder %s32, 1
      %p188 = por %p186, %p187
      %p189 = scmp.ne.s32.totalorder %s180, %s181
      %p190 = scmp.eq.s32.totalorder %s32, 0
      %p191 = por %p189, %p190
      %p192 = scmp.ne.s32.totalorder %s180, %s181
      %p193 = scmp.eq.s32.totalorder %s33, 1
      %p194 = por %p192, %p193
      %p196 = scmp.ne.s32.totalorder %s181, %s195
      %p197 = scmp.eq.s32.totalorder %s33, 0
      %p198 = por %p196, %p197
      %s200 = sadd.s32 %s199, 1
      %p203 = scmp.eq.s32.totalorder %s27, 1
      %p204 = scmp.ne.s32.totalorder %s199, %s201
      %p205 = scmp.eq.s32.totalorder %s27, 0
      %p206 = por %p204, %p205
      %p207 = scmp.ne.s32.totalorder %s199, %s201
      %p208 = scmp.eq.s32.totalorder %s32, 1
      %p209 = por %p207, %p208
      %p210 = scmp.ne.s32.totalorder %s201, %s202
      %p211 = scmp.eq.s32.totalorder %s32, 0
      %p212 = por %p210, %p211
      %p213 = scmp.ne.s32.totalorder %s201, %s202
      %p214 = scmp.eq.s32.totalorder %s33, 1
      %p215 = por %p213, %p214
      %p217 = scmp.ne.s32.totalorder %s202, %s216
      %p218 = scmp.eq.s32.totalorder %s33, 0
      %p219 = por %p217, %p218
      %s221 = sadd.s32 %s220, 1
      %p224 = scmp.eq.s32.totalorder %s27, 1
      %p225 = scmp.ne.s32.totalorder %s220, %s222
      %p226 = scmp.eq.s32.totalorder %s27, 0
      %p227 = por %p225, %p226
      %p228 = scmp.ne.s32.totalorder %s220, %s222
      %p229 = scmp.eq.s32.totalorder %s32, 1
      %p230 = por %p228, %p229
      %p231 = scmp.ne.s32.totalorder %s222, %s223
      %p232 = scmp.eq.s32.totalorder %s32, 0
      %p233 = por %p231, %p232
      %p234 = scmp.ne.s32.totalorder %s222, %s223
      %p235 = scmp.eq.s32.totalorder %s33, 1
      %p236 = por %p234, %p235
      %p238 = scmp.ne.s32.totalorder %s223, %s237
      %p239 = scmp.eq.s32.totalorder %s33, 0
      %p240 = por %p238, %p239
      %s241 = ssub.s32 %s34, %s46
      %s242 = ssub.s32 %s35, %s42
      %s243 = sor.u32 %s241, %s242
      %p244 = scmp.eq.s32.totalorder %s243, 0
      %s246 = sadd.s32 %s245, 1
      %s247 = scalar_select %p244, %s245, %s246
      %p250 = pneg %p244
      %p251 = scmp.eq.s32.totalorder %s27, 1
      %p252 = por %p250, %p251
      %p253 = scmp.ne.s32.totalorder %s245, %s248
      %p254 = scmp.eq.s32.totalorder %s27, 0
      %p255 = por %p253, %p254
      %p256 = scmp.ne.s32.totalorder %s245, %s248
      %p257 = scmp.eq.s32.totalorder %s32, 1
      %p258 = por %p256, %p257
      %p259 = scmp.ne.s32.totalorder %s248, %s249
      %p260 = scmp.eq.s32.totalorder %s32, 0
      %p261 = por %p259, %p260
      %p262 = scmp.ne.s32.totalorder %s248, %s249
      %p263 = scmp.eq.s32.totalorder %s33, 1
      %p264 = por %p262, %p263
      %p266 = scmp.ne.s32.totalorder %s249, %s265
      %p267 = scmp.eq.s32.totalorder %s33, 0
      %p268 = por %p266, %p267
      %s269 = ssub.s32 %s34, %s46
      %s270 = ssub.s32 %s35, %s42
      %s271 = sor.u32 %s269, %s270
      %p272 = scmp.eq.s32.totalorder %s271, 0
      %s274 = sadd.s32 %s273, 1
      %s275 = scalar_select %p272, %s273, %s274
      %p278 = pneg %p272
      %p279 = scmp.eq.s32.totalorder %s27, 1
      %p280 = por %p278, %p279
      %p281 = scmp.ne.s32.totalorder %s273, %s276
      %p282 = scmp.eq.s32.totalorder %s27, 0
      %p283 = por %p281, %p282
      %p284 = scmp.ne.s32.totalorder %s273, %s276
      %p285 = scmp.eq.s32.totalorder %s32, 1
      %p286 = por %p284, %p285
      %p287 = scmp.ne.s32.totalorder %s276, %s277
      %p288 = scmp.eq.s32.totalorder %s32, 0
      %p289 = por %p287, %p288
      %p290 = scmp.ne.s32.totalorder %s276, %s277
      %p291 = scmp.eq.s32.totalorder %s33, 1
      %p292 = por %p290, %p291
      %p294 = scmp.ne.s32.totalorder %s277, %s293
      %p295 = scmp.eq.s32.totalorder %s33, 0
      %p296 = por %p294, %p295
      %p297 = scmp.le.s32.totalorder 1, %s27
      %p298 = scmp.lt.s32.totalorder %s27, 3
      %p299 = pnand %p297, %p298
      %p300 = pneg %p299
      // Predicated region
      $region9: #{tpu_custom_call.1} parent=5 // pred_check
        _
      $region10: #{tpu_custom_call.1} parent=5 // pred_check_branch
        %302 = sbr.rel (%p299) target = $region12
      $region11: #{tpu_custom_call.1} parent=5 // pred_region
        %s303 = ssub.s32 %s27, 1
        // Predicated region
        $region13: #{tpu_custom_call.1} parent=11 // pred_check
          %p304 = pneg %p60
        $region14: #{tpu_custom_call.1} parent=11 // pred_check_branch
          %306 = sbr.rel (%p304) target = $region16
        $region15: #{tpu_custom_call.1} parent=11 // pred_region
          _
        $region16: #{tpu_custom_call.1} parent=11 // pred_fallthru
          _
        // Predicated region
        $region17: #{tpu_custom_call.1} parent=11 // pred_check
          %p307 = pneg %p107
        $region18: #{tpu_custom_call.1} parent=11 // pred_check_branch
          %309 = sbr.rel (%p307) target = $region20
        $region19: #{tpu_custom_call.1} parent=11 // pred_region
          _
        $region20: #{tpu_custom_call.1} parent=11 // pred_fallthru
          _
        // Predicated region
        $region21: #{tpu_custom_call.1} parent=11 // pred_check
          %p310 = pneg %p128
        $region22: #{tpu_custom_call.1} parent=11 // pred_check_branch
          %312 = sbr.rel (%p310) target = $region24
        $region23: #{tpu_custom_call.1} parent=11 // pred_region
          _
        $region24: #{tpu_custom_call.1} parent=11 // pred_fallthru
          _
        // Predicated region
        $region25: #{tpu_custom_call.1} parent=11 // pred_check
          %p313 = pneg %p149
        $region26: #{tpu_custom_call.1} parent=11 // pred_check_branch
          %315 = sbr.rel (%p313) target = $region28
        $region27: #{tpu_custom_call.1} parent=11 // pred_region
          _
        $region28: #{tpu_custom_call.1} parent=11 // pred_fallthru
          _
        // Predicated region
        $region29: #{tpu_custom_call.1} parent=11 // pred_check
          %p316 = pneg %p170
        $region30: #{tpu_custom_call.1} parent=11 // pred_check_branch
          %318 = sbr.rel (%p316) target = $region32
        $region31: #{tpu_custom_call.1} parent=11 // pred_region
          _
        $region32: #{tpu_custom_call.1} parent=11 // pred_fallthru
          _
        // Predicated region
        $region33: #{tpu_custom_call.1} parent=11 // pred_check
          %p319 = pneg %p191
        $region34: #{tpu_custom_call.1} parent=11 // pred_check_branch
          %321 = sbr.rel (%p319) target = $region36
        $region35: #{tpu_custom_call.1} parent=11 // pred_region
          _
        $region36: #{tpu_custom_call.1} parent=11 // pred_fallthru
          _
        // Predicated region
        $region37: #{tpu_custom_call.1} parent=11 // pred_check
          %p322 = pneg %p212
        $region38: #{tpu_custom_call.1} parent=11 // pred_check_branch
          %324 = sbr.rel (%p322) target = $region40
        $region39: #{tpu_custom_call.1} parent=11 // pred_region
          _
        $region40: #{tpu_custom_call.1} parent=11 // pred_fallthru
          _
        // Predicated region
        $region41: #{tpu_custom_call.1} parent=11 // pred_check
          %p325 = pneg %p233
        $region42: #{tpu_custom_call.1} parent=11 // pred_check_branch
          %327 = sbr.rel (%p325) target = $region44
        $region43: #{tpu_custom_call.1} parent=11 // pred_region
          _
        $region44: #{tpu_custom_call.1} parent=11 // pred_fallthru
          _
      $region12: #{tpu_custom_call.1} parent=5 // pred_fallthru
        _
      %p328 = scmp.lt.s32.totalorder %s27, 2
      // Predicated region
      $region45: #{tpu_custom_call.1} parent=5 // pred_check
        %p329 = pneg %p328
      $region46: #{tpu_custom_call.1} parent=5 // pred_check_branch
        %331 = sbr.rel (%p329) target = $region48
      $region47: #{tpu_custom_call.1} parent=5 // pred_region
        // Predicated region
        $region49: #{tpu_custom_call.1} parent=47 // pred_check
          %p332 = pneg %p80
        $region50: #{tpu_custom_call.1} parent=47 // pred_check_branch
          %334 = sbr.rel (%p332) target = $region52
        $region51: #{tpu_custom_call.1} parent=47 // pred_region
          %s335 = sand.u32 %s70, 1
          %s336 = scalar_lea.sflag [#allocation7], %s335
          %s337 = sand.u32 %s70, 1
          %s338 = smul.addr %s337, 128
          %s339 = scalar_lea.vmem [#allocation6], %s338
          %s341 = ssub.s32 2048, 2048
          %342 = vsyncadd %s336, %s341
          %s343 = smul.addr %s34, 16
          %s344 = smul.addr %s343, 128
          %s345 = scalar_lea.hbm %s1, %s344
          %s346 = sshll.u32 %s339, 4
          %s347 = int_to_ptr.vmem [resolvable:$true] %s346
          %352 = dma.hbm_to_vmem [thread:$0]  %s345, 2048, %s347, %s336, 256, 256, 16
        $region52: #{tpu_custom_call.1} parent=47 // pred_fallthru
          _
      $region48: #{tpu_custom_call.1} parent=5 // pred_fallthru
        _
      %p353 = scmp.le.s32.totalorder 1, %s27
      %p354 = scmp.lt.s32.totalorder %s27, 3
      %p355 = pnand %p353, %p354
      %p356 = pneg %p355
      // Predicated region
      $region53: #{tpu_custom_call.1} parent=5 // pred_check
        _
      $region54: #{tpu_custom_call.1} parent=5 // pred_check_branch
        %358 = sbr.rel (%p355) target = $region56
      $region55: #{tpu_custom_call.1} parent=5 // pred_region
        %s359 = ssub.s32 %s27, 1
        %s360 = sand.u32 %s73, 1
        %s361 = scalar_lea.sflag [#allocation7], %s360
        %s362 = sand.u32 %s73, 1
        %s363 = smul.addr %s362, 128
        %s364 = scalar_lea.vmem [#allocation6], %s363
        // Predicated region
        $region57: #{tpu_custom_call.1} parent=55 // pred_check
          %p365 = pneg %p86
        $region58: #{tpu_custom_call.1} parent=55 // pred_check_branch
          %367 = sbr.rel (%p365) target = $region60
        $region59: #{tpu_custom_call.1} parent=55 // pred_region
          %368 = dma.done %s361, 2048
        $region60: #{tpu_custom_call.1} parent=55 // pred_fallthru
          _
        %p369 = pneg %p60
        %p370 = pneg %p57
        %s371 = sand.u32 %s73, 1
        %s372 = scalar_lea.sflag [#allocation7], %s371
        %s373 = sand.u32 %s73, 1
        %s374 = smul.addr %s373, 128
        %s375 = scalar_lea.vmem [#allocation6], %s374
        %p376 = pneg %p86
        %p377 = pneg %p83
        %p378 = pneg %p107
        %p379 = pneg %p104
        %p380 = pneg %p128
        %p381 = pneg %p125
        %p382 = pneg %p149
        %p383 = pneg %p146
        %p384 = pneg %p170
        %p385 = pneg %p167
        %p386 = pneg %p191
        %p387 = pneg %p188
        %p388 = pneg %p212
        %p389 = pneg %p209
        %p390 = pneg %p233
        %p391 = pneg %p230
        %p392 = pneg %p261
        %p393 = pneg %p258
        %s394 = sand.u32 %s248, 1
        %s395 = scalar_lea.sflag [#allocation8], %s394
        %s396 = sand.u32 %s248, 1
        %s397 = smul.addr %s396, 128
        %s398 = scalar_lea.vmem [#allocation9], %s397
        %p399 = pneg %p289
        %p400 = pneg %p286
        %s401 = sand.u32 %s276, 1
        %s402 = scalar_lea.sflag [#allocation11], %s401
        %s403 = sand.u32 %s276, 1
        %s404 = smul.addr %s403, 256
        %s405 = scalar_lea.vmem [#allocation10], %s404
        %s406 = smul.u32 2, %s37
        %s407 = smul.u32 32, %s37
        %p409 = scmp.eq.s32.totalorder %s37, 0
        // Predicated region
        $region61: #{tpu_custom_call.1} parent=55 // pred_check
          %p410 = pneg %p409
        $region62: #{tpu_custom_call.1} parent=55 // pred_check_branch
          %412 = sbr.rel (%p410) target = $region64
        $region63: #{tpu_custom_call.1} parent=55 // pred_region
          %v413 = vld [vmem:[%s364] sm:$0xff]
          %v414 = vld [vmem:[%s364 + $0x8] sm:$0xff]
          %v415 = vld [vmem:[%s364 + $0x10] sm:$0xff]
          %v416 = vld [vmem:[%s364 + $0x18] sm:$0xff]
          %v417 = vld [vmem:[%s364 + $0x20] sm:$0xff]
          %v418 = vld [vmem:[%s364 + $0x28] sm:$0xff]
          %v419 = vld [vmem:[%s364 + $0x30] sm:$0xff]
          %v420 = vld [vmem:[%s364 + $0x38] sm:$0xff]
          %v421 = vld [vmem:[%s364 + $0x40] sm:$0xff]
          %v422 = vld [vmem:[%s364 + $0x48] sm:$0xff]
          %v423 = vld [vmem:[%s364 + $0x50] sm:$0xff]
          %v424 = vld [vmem:[%s364 + $0x58] sm:$0xff]
          %v425 = vld [vmem:[%s364 + $0x60] sm:$0xff]
          %v426 = vld [vmem:[%s364 + $0x68] sm:$0xff]
          %v427 = vld [vmem:[%s364 + $0x70] sm:$0xff]
          %v428 = vld [vmem:[%s364 + $0x78] sm:$0xff]
          %v429 = vpack.c.bf16 %v415, %v413
          %v430 = vpack.c.bf16 %v416, %v414
          %v431 = vpack.c.bf16 %v419, %v417
          %v432 = vpack.c.bf16 %v420, %v418
          %v433 = vpack.c.bf16 %v423, %v421
          %v434 = vpack.c.bf16 %v424, %v422
          %v435 = vpack.c.bf16 %v427, %v425
          %v436 = vpack.c.bf16 %v428, %v426
          %v437 = vld [vmem:[%s2] sm:$0xf]
          %v438 = vld [vmem:[%s5] sm:$0xff]
          %440 = vset.pattern.permute.xlu0 0
          %441 = vperm.xlu0 %440, %v438
          %v442 = vpop.permute.xlu0 %441
          %vm444 = vcmask 523264
          %v446 = vsel %vm444, %v437, 0
          %448 = vmatprep.subr.bf16.mxu0 0
          %449 = vmatpush1.bf16.msra.mxu0 0
          %450 = vmatprep.subr.bf16.mxu0 0
          %451 = vmatpush1.bf16.msra.mxu0 0
          %452 = vmatprep.subr.bf16.mxu0 0
          %453 = vmatpush1.bf16.msra.mxu0 0
          %454 = vmatprep.subr.bf16.mxu0 0
          %455 = vmatpush1.bf16.msra.mxu0 0
          %456 = vmatprep.subr.bf16.mxu0 %v436
          %457 = vmatpush1.bf16.msra.mxu0 %v435
          %458 = vmatprep.subr.bf16.mxu0 %v434
          %459 = vmatpush1.bf16.msra.mxu0 %v433
          %460 = vmatprep.subr.bf16.mxu0 %v432
          %461 = vmatpush1.bf16.msra.mxu0 %v431
          %462 = vmatprep.subr.bf16.mxu0 %v430
          %463 = vmatpush1.bf16.msra.mxu0 %v429
          %464 = vmatprep.subr.bf16.mxu0 0
          %465 = vmatpush2.bf16.msra.mxu0 0
          %466 = vmatprep.subr.bf16.mxu0 0
          %467 = vmatpush2.bf16.msra.mxu0 0
          %468 = vmatprep.subr.bf16.mxu0 0
          %469 = vmatpush2.bf16.msra.mxu0 0
          %470 = vmatprep.subr.bf16.mxu0 0
          %471 = vmatpush2.bf16.msra.mxu0 0
          %472 = vmatprep.subr.bf16.mxu0 0
          %473 = vmatpush2.bf16.msra.mxu0 0
          %474 = vmatprep.subr.bf16.mxu0 0
          %475 = vmatpush2.bf16.msra.mxu0 0
          %476 = vmatprep.subr.bf16.mxu0 0
          %477 = vmatpush2.bf16.msra.mxu0 0
          %478 = vmatprep.subr.bf16.mxu0 0
          %479 = vmatpush2.bf16.msra.mxu0 0
          %480 = vmatprep.mubr.bf16.mxu0 0
          %481 = vmatmul.mubr.bf16.gmra.mxu0 %v446
          %v482 = vpop.f32.mrf.mxu0
          %v483 = vadd.f32 %v442, %v482
          %v484 = vpop.f32.mrf.mxu0
          %v485 = vadd.f32 %v442, %v484
          %v486 = vpop.f32.mrf.mxu0
          %v487 = vpop.f32.mrf.mxu0
          %488 = vdwg.mxu0
          %v489 = vld [vmem:[%s3] sm:$0xf]
          %v490 = vld [vmem:[%s6] sm:$0xff]
          %492 = vset.pattern.permute.xlu0 0
          %493 = vperm.xlu0 %492, %v490
          %v494 = vpop.permute.xlu0 %493
          %v497 = vsel %vm444, %v489, 0
          %499 = vmatprep.subr.bf16.mxu0 0
          %500 = vmatpush1.bf16.msra.mxu0 0
          %501 = vmatprep.subr.bf16.mxu0 0
          %502 = vmatpush1.bf16.msra.mxu0 0
          %503 = vmatprep.subr.bf16.mxu0 0
          %504 = vmatpush1.bf16.msra.mxu0 0
          %505 = vmatprep.subr.bf16.mxu0 0
          %506 = vmatpush1.bf16.msra.mxu0 0
          %507 = vmatprep.subr.bf16.mxu0 %v436
          %508 = vmatpush1.bf16.msra.mxu0 %v435
          %509 = vmatprep.subr.bf16.mxu0 %v434
          %510 = vmatpush1.bf16.msra.mxu0 %v433
          %511 = vmatprep.subr.bf16.mxu0 %v432
          %512 = vmatpush1.bf16.msra.mxu0 %v431
          %513 = vmatprep.subr.bf16.mxu0 %v430
          %514 = vmatpush1.bf16.msra.mxu0 %v429
          %515 = vmatprep.subr.bf16.mxu0 0
          %516 = vmatpush2.bf16.msra.mxu0 0
          %517 = vmatprep.subr.bf16.mxu0 0
          %518 = vmatpush2.bf16.msra.mxu0 0
          %519 = vmatprep.subr.bf16.mxu0 0
          %520 = vmatpush2.bf16.msra.mxu0 0
          %521 = vmatprep.subr.bf16.mxu0 0
          %522 = vmatpush2.bf16.msra.mxu0 0
          %523 = vmatprep.subr.bf16.mxu0 0
          %524 = vmatpush2.bf16.msra.mxu0 0
          %525 = vmatprep.subr.bf16.mxu0 0
          %526 = vmatpush2.bf16.msra.mxu0 0
          %527 = vmatprep.subr.bf16.mxu0 0
          %528 = vmatpush2.bf16.msra.mxu0 0
          %529 = vmatprep.subr.bf16.mxu0 0
          %530 = vmatpush2.bf16.msra.mxu0 0
          %531 = vmatprep.mubr.bf16.mxu0 0
          %532 = vmatmul.mubr.bf16.gmra.mxu0 %v497
          %v533 = vpop.f32.mrf.mxu0
          %v534 = vadd.f32 %v494, %v533
          %v535 = vpop.f32.mrf.mxu0
          %v536 = vadd.f32 %v494, %v535
          %v537 = vpop.f32.mrf.mxu0
          %v538 = vpop.f32.mrf.mxu0
          %539 = vdwg.mxu0
          %v540 = vld [vmem:[%s4] sm:$0xf]
          %v541 = vld [vmem:[%s4 + $0x4] sm:$0xf]
          %v542 = vld [vmem:[%s4 + $0x8] sm:$0xf]
          %v543 = vld [vmem:[%s4 + $0xc] sm:$0xf]
          %v544 = vld [vmem:[%s4 + $0x10] sm:$0xf]
          %v545 = vld [vmem:[%s4 + $0x14] sm:$0xf]
          %v546 = vld [vmem:[%s4 + $0x18] sm:$0xf]
          %v547 = vld [vmem:[%s4 + $0x1c] sm:$0xf]
          %v548 = vld [vmem:[%s7] sm:$0xff]
          %v549 = vld [vmem:[%s7 + $0x8] sm:$0xff]
          %v550 = vld [vmem:[%s7 + $0x10] sm:$0xff]
          %v551 = vld [vmem:[%s7 + $0x18] sm:$0xff]
          %v552 = vld [vmem:[%s7 + $0x20] sm:$0xff]
          %v553 = vld [vmem:[%s7 + $0x28] sm:$0xff]
          %v554 = vld [vmem:[%s7 + $0x30] sm:$0xff]
          %v555 = vld [vmem:[%s7 + $0x38] sm:$0xff]
          %557 = vset.pattern.permute.xlu0 0
          %558 = vperm.xlu0 %557, %v548
          %v559 = vpop.permute.xlu0 %558
          %562 = vset.pattern.permute.xlu0 0
          %563 = vperm.xlu0 %562, %v549
          %v564 = vpop.permute.xlu0 %563
          %567 = vset.pattern.permute.xlu0 0
          %568 = vperm.xlu0 %567, %v550
          %v569 = vpop.permute.xlu0 %568
          %572 = vset.pattern.permute.xlu0 0
          %573 = vperm.xlu0 %572, %v551
          %v574 = vpop.permute.xlu0 %573
          %577 = vset.pattern.permute.xlu0 0
          %578 = vperm.xlu0 %577, %v552
          %v579 = vpop.permute.xlu0 %578
          %582 = vset.pattern.permute.xlu0 0
          %583 = vperm.xlu0 %582, %v553
          %v584 = vpop.permute.xlu0 %583
          %587 = vset.pattern.permute.xlu0 0
          %588 = vperm.xlu0 %587, %v554
          %v589 = vpop.permute.xlu0 %588
          %592 = vset.pattern.permute.xlu0 0
          %593 = vperm.xlu0 %592, %v555
          %v594 = vpop.permute.xlu0 %593
          %v604 = vunpack.c.l.b16 %v540
          %v605 = vunpack.c.l.b16 %v541
          %v606 = vunpack.c.l.b16 %v542
          %v607 = vunpack.c.l.b16 %v543
          %v608 = vunpack.c.l.b16 %v544
          %v609 = vunpack.c.l.b16 %v545
          %v610 = vunpack.c.l.b16 %v546
          %v611 = vunpack.c.l.b16 %v547
          %v612 = vpack.c.b16 %v605, %v604
          %v613 = vpack.c.b16 %v607, %v606
          %v614 = vpack.c.b16 %v609, %v608
          %v615 = vpack.c.b16 %v611, %v610
          %v617 = vsel %vm444, %v612, 0
          %v620 = vsel %vm444, %v613, 0
          %v623 = vsel %vm444, %v614, 0
          %v626 = vsel %vm444, %v615, 0
          %628 = vmatprep.subr.bf16.mxu0 0
          %629 = vmatpush1.bf16.msra.mxu0 0
          %630 = vmatprep.subr.bf16.mxu0 0
          %631 = vmatpush1.bf16.msra.mxu0 0
          %632 = vmatprep.subr.bf16.mxu0 0
          %633 = vmatpush1.bf16.msra.mxu0 0
          %634 = vmatprep.subr.bf16.mxu0 0
          %635 = vmatpush1.bf16.msra.mxu0 0
          %636 = vmatprep.subr.bf16.mxu0 %v436
          %637 = vmatpush1.bf16.msra.mxu0 %v435
          %638 = vmatprep.subr.bf16.mxu0 %v434
          %639 = vmatpush1.bf16.msra.mxu0 %v433
          %640 = vmatprep.subr.bf16.mxu0 %v432
          %641 = vmatpush1.bf16.msra.mxu0 %v431
          %642 = vmatprep.subr.bf16.mxu0 %v430
          %643 = vmatpush1.bf16.msra.mxu0 %v429
          %644 = vmatprep.subr.bf16.mxu0 0
          %645 = vmatpush2.bf16.msra.mxu0 0
          %646 = vmatprep.subr.bf16.mxu0 0
          %647 = vmatpush2.bf16.msra.mxu0 0
          %648 = vmatprep.subr.bf16.mxu0 0
          %649 = vmatpush2.bf16.msra.mxu0 0
          %650 = vmatprep.subr.bf16.mxu0 0
          %651 = vmatpush2.bf16.msra.mxu0 0
          %652 = vmatprep.subr.bf16.mxu0 0
          %653 = vmatpush2.bf16.msra.mxu0 0
          %654 = vmatprep.subr.bf16.mxu0 0
          %655 = vmatpush2.bf16.msra.mxu0 0
          %656 = vmatprep.subr.bf16.mxu0 0
          %657 = vmatpush2.bf16.msra.mxu0 0
          %658 = vmatprep.subr.bf16.mxu0 0
          %659 = vmatpush2.bf16.msra.mxu0 0
          %660 = vmatprep.mubr.bf16.mxu0 0
          %661 = vmatmul.mubr.bf16.gmra.mxu0 %v617
          %v662 = vpop.f32.mrf.mxu0
          %v663 = vadd.f32 %v559, %v662
          %v664 = vpop.f32.mrf.mxu0
          %v665 = vadd.f32 %v559, %v664
          %v666 = vpop.f32.mrf.mxu0
          %v667 = vadd.f32 %v564, %v666
          %v668 = vpop.f32.mrf.mxu0
          %v669 = vadd.f32 %v564, %v668
          %670 = vmatprep.mubr.bf16.mxu0 0
          %671 = vmatmul.mubr.bf16.gmra.mxu0 %v620
          %v672 = vpop.f32.mrf.mxu0
          %v673 = vadd.f32 %v569, %v672
          %v674 = vpop.f32.mrf.mxu0
          %v675 = vadd.f32 %v569, %v674
          %v676 = vpop.f32.mrf.mxu0
          %v677 = vadd.f32 %v574, %v676
          %v678 = vpop.f32.mrf.mxu0
          %v679 = vadd.f32 %v574, %v678
          %680 = vmatprep.mubr.bf16.mxu0 0
          %681 = vmatmul.mubr.bf16.gmra.mxu0 %v623
          %v682 = vpop.f32.mrf.mxu0
          %v683 = vadd.f32 %v579, %v682
          %v684 = vpop.f32.mrf.mxu0
          %v685 = vadd.f32 %v579, %v684
          %v686 = vpop.f32.mrf.mxu0
          %v687 = vadd.f32 %v584, %v686
          %v688 = vpop.f32.mrf.mxu0
          %v689 = vadd.f32 %v584, %v688
          %690 = vmatprep.mubr.bf16.mxu0 0
          %691 = vmatmul.mubr.bf16.gmra.mxu0 %v626
          %v692 = vpop.f32.mrf.mxu0
          %v693 = vadd.f32 %v589, %v692
          %v694 = vpop.f32.mrf.mxu0
          %v695 = vadd.f32 %v589, %v694
          %v696 = vpop.f32.mrf.mxu0
          %v697 = vadd.f32 %v594, %v696
          %v698 = vpop.f32.mrf.mxu0
          %v699 = vadd.f32 %v594, %v698
          %700 = vdwg.mxu0
          %v701 = vpack.c.bf16 %v483, %v483
          %v702 = vpack.c.bf16 %v485, %v485
          %v705 = vunpack.c.l.b16 %v701
          %v706 = vunpack.c.l.b16 %v702
          %v707 = vpack.c.b16 %v706, %v705
          %709 = vst [vmem:[#allocation2] sm:$0xff] %v707
          %v710 = vpack.c.bf16 %v534, %v534
          %v711 = vpack.c.bf16 %v536, %v536
          %v714 = vunpack.c.l.b16 %v710
          %v715 = vunpack.c.l.b16 %v711
          %v716 = vpack.c.b16 %v715, %v714
          %718 = vst [vmem:[#allocation3] sm:$0xff] %v716
          %v719 = vpack.c.bf16 %v667, %v663
          %v720 = vpack.c.bf16 %v669, %v665
          %v721 = vpack.c.bf16 %v677, %v673
          %v722 = vpack.c.bf16 %v679, %v675
          %v723 = vpack.c.bf16 %v687, %v683
          %v724 = vpack.c.bf16 %v689, %v685
          %v725 = vpack.c.bf16 %v697, %v693
          %v726 = vpack.c.bf16 %v699, %v695
          %v735 = vunpack.c.l.b16 %v719
          %v736 = vunpack.c.l.b16 %v720
          %v737 = vunpack.c.h.b16 %v719
          %v738 = vunpack.c.h.b16 %v720
          %v739 = vunpack.c.l.b16 %v721
          %v740 = vunpack.c.l.b16 %v722
          %v741 = vunpack.c.h.b16 %v721
          %v742 = vunpack.c.h.b16 %v722
          %v743 = vunpack.c.l.b16 %v723
          %v744 = vunpack.c.l.b16 %v724
          %v745 = vunpack.c.h.b16 %v723
          %v746 = vunpack.c.h.b16 %v724
          %v747 = vunpack.c.l.b16 %v725
          %v748 = vunpack.c.l.b16 %v726
          %v749 = vunpack.c.h.b16 %v725
          %v750 = vunpack.c.h.b16 %v726
          %v751 = vpack.c.b16 %v736, %v735
          %v752 = vpack.c.b16 %v738, %v737
          %v753 = vpack.c.b16 %v740, %v739
          %v754 = vpack.c.b16 %v742, %v741
          %v755 = vpack.c.b16 %v744, %v743
          %v756 = vpack.c.b16 %v746, %v745
          %v757 = vpack.c.b16 %v748, %v747
          %v758 = vpack.c.b16 %v750, %v749
          %767 = vst [vmem:[#allocation4] sm:$0xff] %v751
          %768 = vst [vmem:[#allocation4 + $0x8] sm:$0xff] %v752
          %769 = vst [vmem:[#allocation4 + $0x10] sm:$0xff] %v753
          %770 = vst [vmem:[#allocation4 + $0x18] sm:$0xff] %v754
          %771 = vst [vmem:[#allocation4 + $0x20] sm:$0xff] %v755
          %772 = vst [vmem:[#allocation4 + $0x28] sm:$0xff] %v756
          %773 = vst [vmem:[#allocation4 + $0x30] sm:$0xff] %v757
          %774 = vst [vmem:[#allocation4 + $0x38] sm:$0xff] %v758
        $region64: #{tpu_custom_call.1} parent=55 // pred_fallthru
          _
        %s775 = smul.u32 %s37, 256
        %s776 = sshra.s32 %s775, 7
        %s777 = sand.u32 %s775, 127
        %s778 = smul.addr %s776, 4
        %s779 = scalar_lea.vmem [#allocation2], %s778
        %v780 = vld [vmem:[%s779] sm:$0xff]
        %v781 = vld [vmem:[#allocation3] sm:$0xff]
        %v783 = vunpack.c.l.b16 %v780
        %v784 = vunpack.c.h.b16 %v780
        %v785 = vpack.c.b16 %v783, %v783
        %v786 = vpack.c.b16 %v784, %v784
        %789 = vxpose.xlu0.c.b16.start [1/8] %v785, 128
        %790 = vxpose.xlu0.c.b16.cont [2/8] 0, 128
        %791 = vxpose.xlu0.c.b16.cont [3/8] 0, 128
        %792 = vxpose.xlu0.c.b16.cont [4/8] 0, 128
        %793 = vxpose.xlu0.c.b16.cont [5/8] 0, 128
        %794 = vxpose.xlu0.c.b16.cont [6/8] 0, 128
        %795 = vxpose.xlu0.c.b16.cont [7/8] 0, 128
        %796 = vxpose.xlu0.c.b16.end [8/8] 0, 128
        %v797 = vpop.trf.xlu0
        %v798 = vpop.trf.xlu0
        %v799 = vpop.trf.xlu0
        %v800 = vpop.trf.xlu0
        %v801 = vpop.trf.xlu0
        %v802 = vpop.trf.xlu0
        %v803 = vpop.trf.xlu0
        %v804 = vpop.trf.xlu0
        %805 = vxpose.xlu0.c.b16.start [1/8] %v786, 128
        %806 = vxpose.xlu0.c.b16.cont [2/8] 0, 128
        %807 = vxpose.xlu0.c.b16.cont [3/8] 0, 128
        %808 = vxpose.xlu0.c.b16.cont [4/8] 0, 128
        %809 = vxpose.xlu0.c.b16.cont [5/8] 0, 128
        %810 = vxpose.xlu0.c.b16.cont [6/8] 0, 128
        %811 = vxpose.xlu0.c.b16.cont [7/8] 0, 128
        %812 = vxpose.xlu0.c.b16.end [8/8] 0, 128
        %v813 = vpop.trf.xlu0
        %v814 = vpop.trf.xlu0
        %v815 = vpop.trf.xlu0
        %v816 = vpop.trf.xlu0
        %v817 = vpop.trf.xlu0
        %v818 = vpop.trf.xlu0
        %v819 = vpop.trf.xlu0
        %v820 = vpop.trf.xlu0
        %v822 = vunpack.c.l.b16 %v781
        %v823 = vunpack.c.h.b16 %v781
        %v824 = vpack.c.b16 %v822, %v822
        %v825 = vpack.c.b16 %v823, %v823
        %vm826 = vcmask 64512
        %v828 = vsel %vm826, %v797, 0
        %v831 = vsel %vm826, %v798, 0
        %v834 = vsel %vm826, %v799, 0
        %v837 = vsel %vm826, %v800, 0
        %v840 = vsel %vm826, %v801, 0
        %v843 = vsel %vm826, %v802, 0
        %v846 = vsel %vm826, %v803, 0
        %v849 = vsel %vm826, %v804, 0
        %v852 = vsel %vm826, %v813, 0
        %v855 = vsel %vm826, %v814, 0
        %v858 = vsel %vm826, %v815, 0
        %v861 = vsel %vm826, %v816, 0
        %v864 = vsel %vm826, %v817, 0
        %v867 = vsel %vm826, %v818, 0
        %v870 = vsel %vm826, %v819, 0
        %v873 = vsel %vm826, %v820, 0
        %vm875 = vcmask 1043456
        %v877 = vsel %vm875, %v824, 0
        %v880 = vsel %vm875, %v825, 0
        %882 = vmatprep.subr.bf16.mxu0 0
        %883 = vmatpush1.bf16.msra.mxu0 0
        %884 = vmatprep.subr.bf16.mxu0 0
        %885 = vmatpush1.bf16.msra.mxu0 0
        %886 = vmatprep.subr.bf16.mxu0 0
        %887 = vmatpush1.bf16.msra.mxu0 0
        %888 = vmatprep.subr.bf16.mxu0 0
        %889 = vmatpush1.bf16.msra.mxu0 0
        %890 = vmatprep.subr.bf16.mxu0 0
        %891 = vmatpush1.bf16.msra.mxu0 0
        %892 = vmatprep.subr.bf16.mxu0 0
        %893 = vmatpush1.bf16.msra.mxu0 0
        %894 = vmatprep.subr.bf16.mxu0 0
        %895 = vmatpush1.bf16.msra.mxu0 0
        %896 = vmatprep.subr.bf16.mxu0 %v880
        %897 = vmatpush1.bf16.msra.mxu0 %v877
        %898 = vmatprep.subr.bf16.mxu0 0
        %899 = vmatpush2.bf16.msra.mxu0 0
        %900 = vmatprep.subr.bf16.mxu0 0
        %901 = vmatpush2.bf16.msra.mxu0 0
        %902 = vmatprep.subr.bf16.mxu0 0
        %903 = vmatpush2.bf16.msra.mxu0 0
        %904 = vmatprep.subr.bf16.mxu0 0
        %905 = vmatpush2.bf16.msra.mxu0 0
        %906 = vmatprep.subr.bf16.mxu0 0
        %907 = vmatpush2.bf16.msra.mxu0 0
        %908 = vmatprep.subr.bf16.mxu0 0
        %909 = vmatpush2.bf16.msra.mxu0 0
        %910 = vmatprep.subr.bf16.mxu0 0
        %911 = vmatpush2.bf16.msra.mxu0 0
        %912 = vmatprep.subr.bf16.mxu0 0
        %913 = vmatpush2.bf16.msra.mxu0 0
        %914 = vmatprep.mubr.bf16.mxu0 0
        %915 = vmatmul.mubr.bf16.gmra.mxu0 %v828
        %v916 = vpop.f32.mrf.mxu0
        %v917 = vadd.f32 0.0, %v916
        %v918 = vpop.f32.mrf.mxu0
        %v919 = vadd.f32 0.0, %v918
        %v920 = vpop.f32.mrf.mxu0
        %v921 = vadd.f32 0.0, %v920
        %v922 = vpop.f32.mrf.mxu0
        %v923 = vadd.f32 0.0, %v922
        %924 = vmatprep.mubr.bf16.mxu0 0
        %925 = vmatmul.mubr.bf16.gmra.mxu0 %v831
        %v926 = vpop.f32.mrf.mxu0
        %v927 = vadd.f32 0.0, %v926
        %v928 = vpop.f32.mrf.mxu0
        %v929 = vadd.f32 0.0, %v928
        %v930 = vpop.f32.mrf.mxu0
        %v931 = vadd.f32 0.0, %v930
        %v932 = vpop.f32.mrf.mxu0
        %v933 = vadd.f32 0.0, %v932
        %934 = vmatprep.mubr.bf16.mxu0 0
        %935 = vmatmul.mubr.bf16.gmra.mxu0 %v834
        %v936 = vpop.f32.mrf.mxu0
        %v937 = vadd.f32 0.0, %v936
        %v938 = vpop.f32.mrf.mxu0
        %v939 = vadd.f32 0.0, %v938
        %v940 = vpop.f32.mrf.mxu0
        %v941 = vadd.f32 0.0, %v940
        %v942 = vpop.f32.mrf.mxu0
        %v943 = vadd.f32 0.0, %v942
        %944 = vmatprep.mubr.bf16.mxu0 0
        %945 = vmatmul.mubr.bf16.gmra.mxu0 %v837
        %v946 = vpop.f32.mrf.mxu0
        %v947 = vadd.f32 0.0, %v946
        %v948 = vpop.f32.mrf.mxu0
        %v949 = vadd.f32 0.0, %v948
        %v950 = vpop.f32.mrf.mxu0
        %v951 = vadd.f32 0.0, %v950
        %v952 = vpop.f32.mrf.mxu0
        %v953 = vadd.f32 0.0, %v952
        %954 = vmatprep.mubr.bf16.mxu0 0
        %955 = vmatmul.mubr.bf16.gmra.mxu0 %v840
        %v956 = vpop.f32.mrf.mxu0
        %v957 = vadd.f32 0.0, %v956
        %v958 = vpop.f32.mrf.mxu0
        %v959 = vadd.f32 0.0, %v958
        %v960 = vpop.f32.mrf.mxu0
        %v961 = vadd.f32 0.0, %v960
        %v962 = vpop.f32.mrf.mxu0
        %v963 = vadd.f32 0.0, %v962
        %964 = vmatprep.mubr.bf16.mxu0 0
        %965 = vmatmul.mubr.bf16.gmra.mxu0 %v843
        %v966 = vpop.f32.mrf.mxu0
        %v967 = vadd.f32 0.0, %v966
        %v968 = vpop.f32.mrf.mxu0
        %v969 = vadd.f32 0.0, %v968
        %v970 = vpop.f32.mrf.mxu0
        %v971 = vadd.f32 0.0, %v970
        %v972 = vpop.f32.mrf.mxu0
        %v973 = vadd.f32 0.0, %v972
        %974 = vmatprep.mubr.bf16.mxu0 0
        %975 = vmatmul.mubr.bf16.gmra.mxu0 %v846
        %v976 = vpop.f32.mrf.mxu0
        %v977 = vadd.f32 0.0, %v976
        %v978 = vpop.f32.mrf.mxu0
        %v979 = vadd.f32 0.0, %v978
        %v980 = vpop.f32.mrf.mxu0
        %v981 = vadd.f32 0.0, %v980
        %v982 = vpop.f32.mrf.mxu0
        %v983 = vadd.f32 0.0, %v982
        %984 = vmatprep.mubr.bf16.mxu0 0
        %985 = vmatmul.mubr.bf16.gmra.mxu0 %v849
        %v986 = vpop.f32.mrf.mxu0
        %v987 = vadd.f32 0.0, %v986
        %v988 = vpop.f32.mrf.mxu0
        %v989 = vadd.f32 0.0, %v988
        %v990 = vpop.f32.mrf.mxu0
        %v991 = vadd.f32 0.0, %v990
        %v992 = vpop.f32.mrf.mxu0
        %v993 = vadd.f32 0.0, %v992
        %994 = vmatprep.mubr.bf16.mxu0 0
        %995 = vmatmul.mubr.bf16.gmra.mxu0 %v852
        %v996 = vpop.f32.mrf.mxu0
        %v997 = vadd.f32 0.0, %v996
        %v998 = vpop.f32.mrf.mxu0
        %v999 = vadd.f32 0.0, %v998
        %v1000 = vpop.f32.mrf.mxu0
        %v1001 = vadd.f32 0.0, %v1000
        %v1002 = vpop.f32.mrf.mxu0
        %v1003 = vadd.f32 0.0, %v1002
        %1004 = vmatprep.mubr.bf16.mxu0 0
        %1005 = vmatmul.mubr.bf16.gmra.mxu0 %v855
        %v1006 = vpop.f32.mrf.mxu0
        %v1007 = vadd.f32 0.0, %v1006
        %v1008 = vpop.f32.mrf.mxu0
        %v1009 = vadd.f32 0.0, %v1008
        %v1010 = vpop.f32.mrf.mxu0
        %v1011 = vadd.f32 0.0, %v1010
        %v1012 = vpop.f32.mrf.mxu0
        %v1013 = vadd.f32 0.0, %v1012
        %1014 = vmatprep.mubr.bf16.mxu0 0
        %1015 = vmatmul.mubr.bf16.gmra.mxu0 %v858
        %v1016 = vpop.f32.mrf.mxu0
        %v1017 = vadd.f32 0.0, %v1016
        %v1018 = vpop.f32.mrf.mxu0
        %v1019 = vadd.f32 0.0, %v1018
        %v1020 = vpop.f32.mrf.mxu0
        %v1021 = vadd.f32 0.0, %v1020
        %v1022 = vpop.f32.mrf.mxu0
        %v1023 = vadd.f32 0.0, %v1022
        %1024 = vmatprep.mubr.bf16.mxu0 0
        %1025 = vmatmul.mubr.bf16.gmra.mxu0 %v861
        %v1026 = vpop.f32.mrf.mxu0
        %v1027 = vadd.f32 0.0, %v1026
        %v1028 = vpop.f32.mrf.mxu0
        %v1029 = vadd.f32 0.0, %v1028
        %v1030 = vpop.f32.mrf.mxu0
        %v1031 = vadd.f32 0.0, %v1030
        %v1032 = vpop.f32.mrf.mxu0
        %v1033 = vadd.f32 0.0, %v1032
        %1034 = vmatprep.mubr.bf16.mxu0 0
        %1035 = vmatmul.mubr.bf16.gmra.mxu0 %v864
        %v1036 = vpop.f32.mrf.mxu0
        %v1037 = vadd.f32 0.0, %v1036
        %v1038 = vpop.f32.mrf.mxu0
        %v1039 = vadd.f32 0.0, %v1038
        %v1040 = vpop.f32.mrf.mxu0
        %v1041 = vadd.f32 0.0, %v1040
        %v1042 = vpop.f32.mrf.mxu0
        %v1043 = vadd.f32 0.0, %v1042
        %1044 = vmatprep.mubr.bf16.mxu0 0
        %1045 = vmatmul.mubr.bf16.gmra.mxu0 %v867
        %v1046 = vpop.f32.mrf.mxu0
        %v1047 = vadd.f32 0.0, %v1046
        %v1048 = vpop.f32.mrf.mxu0
        %v1049 = vadd.f32 0.0, %v1048
        %v1050 = vpop.f32.mrf.mxu0
        %v1051 = vadd.f32 0.0, %v1050
        %v1052 = vpop.f32.mrf.mxu0
        %v1053 = vadd.f32 0.0, %v1052
        %1054 = vmatprep.mubr.bf16.mxu0 0
        %1055 = vmatmul.mubr.bf16.gmra.mxu0 %v870
        %v1056 = vpop.f32.mrf.mxu0
        %v1057 = vadd.f32 0.0, %v1056
        %v1058 = vpop.f32.mrf.mxu0
        %v1059 = vadd.f32 0.0, %v1058
        %v1060 = vpop.f32.mrf.mxu0
        %v1061 = vadd.f32 0.0, %v1060
        %v1062 = vpop.f32.mrf.mxu0
        %v1063 = vadd.f32 0.0, %v1062
        %1064 = vmatprep.mubr.bf16.mxu0 0
        %1065 = vmatmul.mubr.bf16.gmra.mxu0 %v873
        %v1066 = vpop.f32.mrf.mxu0
        %v1067 = vadd.f32 0.0, %v1066
        %v1068 = vpop.f32.mrf.mxu0
        %v1069 = vadd.f32 0.0, %v1068
        %v1070 = vpop.f32.mrf.mxu0
        %v1071 = vadd.f32 0.0, %v1070
        %v1072 = vpop.f32.mrf.mxu0
        %v1073 = vadd.f32 0.0, %v1072
        %1074 = vdwg.mxu0
        %v1075 = vmax.f32 %v917, %v919
        %1076 = vmax.xlane.f32.xlu0 %v1075
        %v1077 = vpop.xlane.xlu0 %1076
        %v1078 = vmax.f32 %v921, %v923
        %1079 = vmax.xlane.f32.xlu0 %v1078
        %v1080 = vpop.xlane.xlu0 %1079
        %v1081 = vmax.f32 %v927, %v929
        %1082 = vmax.xlane.f32.xlu0 %v1081
        %v1083 = vpop.xlane.xlu0 %1082
        %v1084 = vmax.f32 %v931, %v933
        %1085 = vmax.xlane.f32.xlu0 %v1084
        %v1086 = vpop.xlane.xlu0 %1085
        %v1087 = vmax.f32 %v937, %v939
        %1088 = vmax.xlane.f32.xlu0 %v1087
        %v1089 = vpop.xlane.xlu0 %1088
        %v1090 = vmax.f32 %v941, %v943
        %1091 = vmax.xlane.f32.xlu0 %v1090
        %v1092 = vpop.xlane.xlu0 %1091
        %v1093 = vmax.f32 %v947, %v949
        %1094 = vmax.xlane.f32.xlu0 %v1093
        %v1095 = vpop.xlane.xlu0 %1094
        %v1096 = vmax.f32 %v951, %v953
        %1097 = vmax.xlane.f32.xlu0 %v1096
        %v1098 = vpop.xlane.xlu0 %1097
        %v1099 = vmax.f32 %v957, %v959
        %1100 = vmax.xlane.f32.xlu0 %v1099
        %v1101 = vpop.xlane.xlu0 %1100
        %v1102 = vmax.f32 %v961, %v963
        %1103 = vmax.xlane.f32.xlu0 %v1102
        %v1104 = vpop.xlane.xlu0 %1103
        %v1105 = vmax.f32 %v967, %v969
        %1106 = vmax.xlane.f32.xlu0 %v1105
        %v1107 = vpop.xlane.xlu0 %1106
        %v1108 = vmax.f32 %v971, %v973
        %1109 = vmax.xlane.f32.xlu0 %v1108
        %v1110 = vpop.xlane.xlu0 %1109
        %v1111 = vmax.f32 %v977, %v979
        %1112 = vmax.xlane.f32.xlu0 %v1111
        %v1113 = vpop.xlane.xlu0 %1112
        %v1114 = vmax.f32 %v981, %v983
        %1115 = vmax.xlane.f32.xlu0 %v1114
        %v1116 = vpop.xlane.xlu0 %1115
        %v1117 = vmax.f32 %v987, %v989
        %1118 = vmax.xlane.f32.xlu0 %v1117
        %v1119 = vpop.xlane.xlu0 %1118
        %v1120 = vmax.f32 %v991, %v993
        %1121 = vmax.xlane.f32.xlu0 %v1120
        %v1122 = vpop.xlane.xlu0 %1121
        %v1123 = vmax.f32 %v997, %v999
        %1124 = vmax.xlane.f32.xlu0 %v1123
        %v1125 = vpop.xlane.xlu0 %1124
        %v1126 = vmax.f32 %v1001, %v1003
        %1127 = vmax.xlane.f32.xlu0 %v1126
        %v1128 = vpop.xlane.xlu0 %1127
        %v1129 = vmax.f32 %v1007, %v1009
        %1130 = vmax.xlane.f32.xlu0 %v1129
        %v1131 = vpop.xlane.xlu0 %1130
        %v1132 = vmax.f32 %v1011, %v1013
        %1133 = vmax.xlane.f32.xlu0 %v1132
        %v1134 = vpop.xlane.xlu0 %1133
        %v1135 = vmax.f32 %v1017, %v1019
        %1136 = vmax.xlane.f32.xlu0 %v1135
        %v1137 = vpop.xlane.xlu0 %1136
        %v1138 = vmax.f32 %v1021, %v1023
        %1139 = vmax.xlane.f32.xlu0 %v1138
        %v1140 = vpop.xlane.xlu0 %1139
        %v1141 = vmax.f32 %v1027, %v1029
        %1142 = vmax.xlane.f32.xlu0 %v1141
        %v1143 = vpop.xlane.xlu0 %1142
        %v1144 = vmax.f32 %v1031, %v1033
        %1145 = vmax.xlane.f32.xlu0 %v1144
        %v1146 = vpop.xlane.xlu0 %1145
        %v1147 = vmax.f32 %v1037, %v1039
        %1148 = vmax.xlane.f32.xlu0 %v1147
        %v1149 = vpop.xlane.xlu0 %1148
        %v1150 = vmax.f32 %v1041, %v1043
        %1151 = vmax.xlane.f32.xlu0 %v1150
        %v1152 = vpop.xlane.xlu0 %1151
        %v1153 = vmax.f32 %v1047, %v1049
        %1154 = vmax.xlane.f32.xlu0 %v1153
        %v1155 = vpop.xlane.xlu0 %1154
        %v1156 = vmax.f32 %v1051, %v1053
        %1157 = vmax.xlane.f32.xlu0 %v1156
        %v1158 = vpop.xlane.xlu0 %1157
        %v1159 = vmax.f32 %v1057, %v1059
        %1160 = vmax.xlane.f32.xlu0 %v1159
        %v1161 = vpop.xlane.xlu0 %1160
        %v1162 = vmax.f32 %v1061, %v1063
        %1163 = vmax.xlane.f32.xlu0 %v1162
        %v1164 = vpop.xlane.xlu0 %1163
        %v1165 = vmax.f32 %v1067, %v1069
        %1166 = vmax.xlane.f32.xlu0 %v1165
        %v1167 = vpop.xlane.xlu0 %1166
        %v1168 = vmax.f32 %v1071, %v1073
        %1169 = vmax.xlane.f32.xlu0 %v1168
        %v1170 = vpop.xlane.xlu0 %1169
        %v1171 = vsub.f32 %v917, %v1077
        %v1172 = vsub.f32 %v919, %v1077
        %v1173 = vsub.f32 %v921, %v1080
        %v1174 = vsub.f32 %v923, %v1080
        %v1175 = vsub.f32 %v927, %v1083
        %v1176 = vsub.f32 %v929, %v1083
        %v1177 = vsub.f32 %v931, %v1086
        %v1178 = vsub.f32 %v933, %v1086
        %v1179 = vsub.f32 %v937, %v1089
        %v1180 = vsub.f32 %v939, %v1089
        %v1181 = vsub.f32 %v941, %v1092
        %v1182 = vsub.f32 %v943, %v1092
        %v1183 = vsub.f32 %v947, %v1095
        %v1184 = vsub.f32 %v949, %v1095
        %v1185 = vsub.f32 %v951, %v1098
        %v1186 = vsub.f32 %v953, %v1098
        %v1187 = vsub.f32 %v957, %v1101
        %v1188 = vsub.f32 %v959, %v1101
        %v1189 = vsub.f32 %v961, %v1104
        %v1190 = vsub.f32 %v963, %v1104
        %v1191 = vsub.f32 %v967, %v1107
        %v1192 = vsub.f32 %v969, %v1107
        %v1193 = vsub.f32 %v971, %v1110
        %v1194 = vsub.f32 %v973, %v1110
        %v1195 = vsub.f32 %v977, %v1113
        %v1196 = vsub.f32 %v979, %v1113
        %v1197 = vsub.f32 %v981, %v1116
        %v1198 = vsub.f32 %v983, %v1116
        %v1199 = vsub.f32 %v987, %v1119
        %v1200 = vsub.f32 %v989, %v1119
        %v1201 = vsub.f32 %v991, %v1122
        %v1202 = vsub.f32 %v993, %v1122
        %v1203 = vsub.f32 %v997, %v1125
        %v1204 = vsub.f32 %v999, %v1125
        %v1205 = vsub.f32 %v1001, %v1128
        %v1206 = vsub.f32 %v1003, %v1128
        %v1207 = vsub.f32 %v1007, %v1131
        %v1208 = vsub.f32 %v1009, %v1131
        %v1209 = vsub.f32 %v1011, %v1134
        %v1210 = vsub.f32 %v1013, %v1134
        %v1211 = vsub.f32 %v1017, %v1137
        %v1212 = vsub.f32 %v1019, %v1137
        %v1213 = vsub.f32 %v1021, %v1140
        %v1214 = vsub.f32 %v1023, %v1140
        %v1215 = vsub.f32 %v1027, %v1143
        %v1216 = vsub.f32 %v1029, %v1143
        %v1217 = vsub.f32 %v1031, %v1146
        %v1218 = vsub.f32 %v1033, %v1146
        %v1219 = vsub.f32 %v1037, %v1149
        %v1220 = vsub.f32 %v1039, %v1149
        %v1221 = vsub.f32 %v1041, %v1152
        %v1222 = vsub.f32 %v1043, %v1152
        %v1223 = vsub.f32 %v1047, %v1155
        %v1224 = vsub.f32 %v1049, %v1155
        %v1225 = vsub.f32 %v1051, %v1158
        %v1226 = vsub.f32 %v1053, %v1158
        %v1227 = vsub.f32 %v1057, %v1161
        %v1228 = vsub.f32 %v1059, %v1161
        %v1229 = vsub.f32 %v1061, %v1164
        %v1230 = vsub.f32 %v1063, %v1164
        %v1231 = vsub.f32 %v1067, %v1167
        %v1232 = vsub.f32 %v1069, %v1167
        %v1233 = vsub.f32 %v1071, %v1170
        %v1234 = vsub.f32 %v1073, %v1170
        %v1235 = vmul.f32 %v1171, 1.442695
        %v1236 = vpow.pop %v1235
        %v1237 = vmul.f32 %v1172, 1.442695
        %v1238 = vpow.pop %v1237
        %v1239 = vmul.f32 %v1173, 1.442695
        %v1240 = vpow.pop %v1239
        %v1241 = vmul.f32 %v1174, 1.442695
        %v1242 = vpow.pop %v1241
        %v1243 = vmul.f32 %v1175, 1.442695
        %v1244 = vpow.pop %v1243
        %v1245 = vmul.f32 %v1176, 1.442695
        %v1246 = vpow.pop %v1245
        %v1247 = vmul.f32 %v1177, 1.442695
        %v1248 = vpow.pop %v1247
        %v1249 = vmul.f32 %v1178, 1.442695
        %v1250 = vpow.pop %v1249
        %v1251 = vmul.f32 %v1179, 1.442695
        %v1252 = vpow.pop %v1251
        %v1253 = vmul.f32 %v1180, 1.442695
        %v1254 = vpow.pop %v1253
        %v1255 = vmul.f32 %v1181, 1.442695
        %v1256 = vpow.pop %v1255
        %v1257 = vmul.f32 %v1182, 1.442695
        %v1258 = vpow.pop %v1257
        %v1259 = vmul.f32 %v1183, 1.442695
        %v1260 = vpow.pop %v1259
        %v1261 = vmul.f32 %v1184, 1.442695
        %v1262 = vpow.pop %v1261
        %v1263 = vmul.f32 %v1185, 1.442695
        %v1264 = vpow.pop %v1263
        %v1265 = vmul.f32 %v1186, 1.442695
        %v1266 = vpow.pop %v1265
        %v1267 = vmul.f32 %v1187, 1.442695
        %v1268 = vpow.pop %v1267
        %v1269 = vmul.f32 %v1188, 1.442695
        %v1270 = vpow.pop %v1269
        %v1271 = vmul.f32 %v1189, 1.442695
        %v1272 = vpow.pop %v1271
        %v1273 = vmul.f32 %v1190, 1.442695
        %v1274 = vpow.pop %v1273
        %v1275 = vmul.f32 %v1191, 1.442695
        %v1276 = vpow.pop %v1275
        %v1277 = vmul.f32 %v1192, 1.442695
        %v1278 = vpow.pop %v1277
        %v1279 = vmul.f32 %v1193, 1.442695
        %v1280 = vpow.pop %v1279
        %v1281 = vmul.f32 %v1194, 1.442695
        %v1282 = vpow.pop %v1281
        %v1283 = vmul.f32 %v1195, 1.442695
        %v1284 = vpow.pop %v1283
        %v1285 = vmul.f32 %v1196, 1.442695
        %v1286 = vpow.pop %v1285
        %v1287 = vmul.f32 %v1197, 1.442695
        %v1288 = vpow.pop %v1287
        %v1289 = vmul.f32 %v1198, 1.442695
        %v1290 = vpow.pop %v1289
        %v1291 = vmul.f32 %v1199, 1.442695
        %v1292 = vpow.pop %v1291
        %v1293 = vmul.f32 %v1200, 1.442695
        %v1294 = vpow.pop %v1293
        %v1295 = vmul.f32 %v1201, 1.442695
        %v1296 = vpow.pop %v1295
        %v1297 = vmul.f32 %v1202, 1.442695
        %v1298 = vpow.pop %v1297
        %v1299 = vmul.f32 %v1203, 1.442695
        %v1300 = vpow.pop %v1299
        %v1301 = vmul.f32 %v1204, 1.442695
        %v1302 = vpow.pop %v1301
        %v1303 = vmul.f32 %v1205, 1.442695
        %v1304 = vpow.pop %v1303
        %v1305 = vmul.f32 %v1206, 1.442695
        %v1306 = vpow.pop %v1305
        %v1307 = vmul.f32 %v1207, 1.442695
        %v1308 = vpow.pop %v1307
        %v1309 = vmul.f32 %v1208, 1.442695
        %v1310 = vpow.pop %v1309
        %v1311 = vmul.f32 %v1209, 1.442695
        %v1312 = vpow.pop %v1311
        %v1313 = vmul.f32 %v1210, 1.442695
        %v1314 = vpow.pop %v1313
        %v1315 = vmul.f32 %v1211, 1.442695
        %v1316 = vpow.pop %v1315
        %v1317 = vmul.f32 %v1212, 1.442695
        %v1318 = vpow.pop %v1317
        %v1319 = vmul.f32 %v1213, 1.442695
        %v1320 = vpow.pop %v1319
        %v1321 = vmul.f32 %v1214, 1.442695
        %v1322 = vpow.pop %v1321
        %v1323 = vmul.f32 %v1215, 1.442695
        %v1324 = vpow.pop %v1323
        %v1325 = vmul.f32 %v1216, 1.442695
        %v1326 = vpow.pop %v1325
        %v1327 = vmul.f32 %v1217, 1.442695
        %v1328 = vpow.pop %v1327
        %v1329 = vmul.f32 %v1218, 1.442695
        %v1330 = vpow.pop %v1329
        %v1331 = vmul.f32 %v1219, 1.442695
        %v1332 = vpow.pop %v1331
        %v1333 = vmul.f32 %v1220, 1.442695
        %v1334 = vpow.pop %v1333
        %v1335 = vmul.f32 %v1221, 1.442695
        %v1336 = vpow.pop %v1335
        %v1337 = vmul.f32 %v1222, 1.442695
        %v1338 = vpow.pop %v1337
        %v1339 = vmul.f32 %v1223, 1.442695
        %v1340 = vpow.pop %v1339
        %v1341 = vmul.f32 %v1224, 1.442695
        %v1342 = vpow.pop %v1341
        %v1343 = vmul.f32 %v1225, 1.442695
        %v1344 = vpow.pop %v1343
        %v1345 = vmul.f32 %v1226, 1.442695
        %v1346 = vpow.pop %v1345
        %v1347 = vmul.f32 %v1227, 1.442695
        %v1348 = vpow.pop %v1347
        %v1349 = vmul.f32 %v1228, 1.442695
        %v1350 = vpow.pop %v1349
        %v1351 = vmul.f32 %v1229, 1.442695
        %v1352 = vpow.pop %v1351
        %v1353 = vmul.f32 %v1230, 1.442695
        %v1354 = vpow.pop %v1353
        %v1355 = vmul.f32 %v1231, 1.442695
        %v1356 = vpow.pop %v1355
        %v1357 = vmul.f32 %v1232, 1.442695
        %v1358 = vpow.pop %v1357
        %v1359 = vmul.f32 %v1233, 1.442695
        %v1360 = vpow.pop %v1359
        %v1361 = vmul.f32 %v1234, 1.442695
        %v1362 = vpow.pop %v1361
        %v1363 = vadd.f32 %v1236, %v1238
        %1364 = vadd.xlane.f32.xlu0 %v1363
        %v1365 = vpop.xlane.xlu0 %1364
        %v1366 = vadd.f32 %v1240, %v1242
        %1367 = vadd.xlane.f32.xlu0 %v1366
        %v1368 = vpop.xlane.xlu0 %1367
        %v1369 = vadd.f32 %v1244, %v1246
        %1370 = vadd.xlane.f32.xlu0 %v1369
        %v1371 = vpop.xlane.xlu0 %1370
        %v1372 = vadd.f32 %v1248, %v1250
        %1373 = vadd.xlane.f32.xlu0 %v1372
        %v1374 = vpop.xlane.xlu0 %1373
        %v1375 = vadd.f32 %v1252, %v1254
        %1376 = vadd.xlane.f32.xlu0 %v1375
        %v1377 = vpop.xlane.xlu0 %1376
        %v1378 = vadd.f32 %v1256, %v1258
        %1379 = vadd.xlane.f32.xlu0 %v1378
        %v1380 = vpop.xlane.xlu0 %1379
        %v1381 = vadd.f32 %v1260, %v1262
        %1382 = vadd.xlane.f32.xlu0 %v1381
        %v1383 = vpop.xlane.xlu0 %1382
        %v1384 = vadd.f32 %v1264, %v1266
        %1385 = vadd.xlane.f32.xlu0 %v1384
        %v1386 = vpop.xlane.xlu0 %1385
        %v1387 = vadd.f32 %v1268, %v1270
        %1388 = vadd.xlane.f32.xlu0 %v1387
        %v1389 = vpop.xlane.xlu0 %1388
        %v1390 = vadd.f32 %v1272, %v1274
        %1391 = vadd.xlane.f32.xlu0 %v1390
        %v1392 = vpop.xlane.xlu0 %1391
        %v1393 = vadd.f32 %v1276, %v1278
        %1394 = vadd.xlane.f32.xlu0 %v1393
        %v1395 = vpop.xlane.xlu0 %1394
        %v1396 = vadd.f32 %v1280, %v1282
        %1397 = vadd.xlane.f32.xlu0 %v1396
        %v1398 = vpop.xlane.xlu0 %1397
        %v1399 = vadd.f32 %v1284, %v1286
        %1400 = vadd.xlane.f32.xlu0 %v1399
        %v1401 = vpop.xlane.xlu0 %1400
        %v1402 = vadd.f32 %v1288, %v1290
        %1403 = vadd.xlane.f32.xlu0 %v1402
        %v1404 = vpop.xlane.xlu0 %1403
        %v1405 = vadd.f32 %v1292, %v1294
        %1406 = vadd.xlane.f32.xlu0 %v1405
        %v1407 = vpop.xlane.xlu0 %1406
        %v1408 = vadd.f32 %v1296, %v1298
        %1409 = vadd.xlane.f32.xlu0 %v1408
        %v1410 = vpop.xlane.xlu0 %1409
        %v1411 = vadd.f32 %v1300, %v1302
        %1412 = vadd.xlane.f32.xlu0 %v1411
        %v1413 = vpop.xlane.xlu0 %1412
        %v1414 = vadd.f32 %v1304, %v1306
        %1415 = vadd.xlane.f32.xlu0 %v1414
        %v1416 = vpop.xlane.xlu0 %1415
        %v1417 = vadd.f32 %v1308, %v1310
        %1418 = vadd.xlane.f32.xlu0 %v1417
        %v1419 = vpop.xlane.xlu0 %1418
        %v1420 = vadd.f32 %v1312, %v1314
        %1421 = vadd.xlane.f32.xlu0 %v1420
        %v1422 = vpop.xlane.xlu0 %1421
        %v1423 = vadd.f32 %v1316, %v1318
        %1424 = vadd.xlane.f32.xlu0 %v1423
        %v1425 = vpop.xlane.xlu0 %1424
        %v1426 = vadd.f32 %v1320, %v1322
        %1427 = vadd.xlane.f32.xlu0 %v1426
        %v1428 = vpop.xlane.xlu0 %1427
        %v1429 = vadd.f32 %v1324, %v1326
        %1430 = vadd.xlane.f32.xlu0 %v1429
        %v1431 = vpop.xlane.xlu0 %1430
        %v1432 = vadd.f32 %v1328, %v1330
        %1433 = vadd.xlane.f32.xlu0 %v1432
        %v1434 = vpop.xlane.xlu0 %1433
        %v1435 = vadd.f32 %v1332, %v1334
        %1436 = vadd.xlane.f32.xlu0 %v1435
        %v1437 = vpop.xlane.xlu0 %1436
        %v1438 = vadd.f32 %v1336, %v1338
        %1439 = vadd.xlane.f32.xlu0 %v1438
        %v1440 = vpop.xlane.xlu0 %1439
        %v1441 = vadd.f32 %v1340, %v1342
        %1442 = vadd.xlane.f32.xlu0 %v1441
        %v1443 = vpop.xlane.xlu0 %1442
        %v1444 = vadd.f32 %v1344, %v1346
        %1445 = vadd.xlane.f32.xlu0 %v1444
        %v1446 = vpop.xlane.xlu0 %1445
        %v1447 = vadd.f32 %v1348, %v1350
        %1448 = vadd.xlane.f32.xlu0 %v1447
        %v1449 = vpop.xlane.xlu0 %1448
        %v1450 = vadd.f32 %v1352, %v1354
        %1451 = vadd.xlane.f32.xlu0 %v1450
        %v1452 = vpop.xlane.xlu0 %1451
        %v1453 = vadd.f32 %v1356, %v1358
        %1454 = vadd.xlane.f32.xlu0 %v1453
        %v1455 = vpop.xlane.xlu0 %1454
        %v1456 = vadd.f32 %v1360, %v1362
        %1457 = vadd.xlane.f32.xlu0 %v1456
        %v1458 = vpop.xlane.xlu0 %1457
        %v1459 = vrcp.pop %v1365
        %v1460 = vrcp.pop %v1368
        %v1461 = vrcp.pop %v1371
        %v1462 = vrcp.pop %v1374
        %v1463 = vrcp.pop %v1377
        %v1464 = vrcp.pop %v1380
        %v1465 = vrcp.pop %v1383
        %v1466 = vrcp.pop %v1386
        %v1467 = vrcp.pop %v1389
        %v1468 = vrcp.pop %v1392
        %v1469 = vrcp.pop %v1395
        %v1470 = vrcp.pop %v1398
        %v1471 = vrcp.pop %v1401
        %v1472 = vrcp.pop %v1404
        %v1473 = vrcp.pop %v1407
        %v1474 = vrcp.pop %v1410
        %v1475 = vrcp.pop %v1413
        %v1476 = vrcp.pop %v1416
        %v1477 = vrcp.pop %v1419
        %v1478 = vrcp.pop %v1422
        %v1479 = vrcp.pop %v1425
        %v1480 = vrcp.pop %v1428
        %v1481 = vrcp.pop %v1431
        %v1482 = vrcp.pop %v1434
        %v1483 = vrcp.pop %v1437
        %v1484 = vrcp.pop %v1440
        %v1485 = vrcp.pop %v1443
        %v1486 = vrcp.pop %v1446
        %v1487 = vrcp.pop %v1449
        %v1488 = vrcp.pop %v1452
        %v1489 = vrcp.pop %v1455
        %v1490 = vrcp.pop %v1458
        %v1491 = vmul.f32 %v1236, %v1459
        %v1492 = vmul.f32 %v1238, %v1459
        %v1493 = vmul.f32 %v1240, %v1460
        %v1494 = vmul.f32 %v1242, %v1460
        %v1495 = vmul.f32 %v1244, %v1461
        %v1496 = vmul.f32 %v1246, %v1461
        %v1497 = vmul.f32 %v1248, %v1462
        %v1498 = vmul.f32 %v1250, %v1462
        %v1499 = vmul.f32 %v1252, %v1463
        %v1500 = vmul.f32 %v1254, %v1463
        %v1501 = vmul.f32 %v1256, %v1464
        %v1502 = vmul.f32 %v1258, %v1464
        %v1503 = vmul.f32 %v1260, %v1465
        %v1504 = vmul.f32 %v1262, %v1465
        %v1505 = vmul.f32 %v1264, %v1466
        %v1506 = vmul.f32 %v1266, %v1466
        %v1507 = vmul.f32 %v1268, %v1467
        %v1508 = vmul.f32 %v1270, %v1467
        %v1509 = vmul.f32 %v1272, %v1468
        %v1510 = vmul.f32 %v1274, %v1468
        %v1511 = vmul.f32 %v1276, %v1469
        %v1512 = vmul.f32 %v1278, %v1469
        %v1513 = vmul.f32 %v1280, %v1470
        %v1514 = vmul.f32 %v1282, %v1470
        %v1515 = vmul.f32 %v1284, %v1471
        %v1516 = vmul.f32 %v1286, %v1471
        %v1517 = vmul.f32 %v1288, %v1472
        %v1518 = vmul.f32 %v1290, %v1472
        %v1519 = vmul.f32 %v1292, %v1473
        %v1520 = vmul.f32 %v1294, %v1473
        %v1521 = vmul.f32 %v1296, %v1474
        %v1522 = vmul.f32 %v1298, %v1474
        %v1523 = vmul.f32 %v1300, %v1475
        %v1524 = vmul.f32 %v1302, %v1475
        %v1525 = vmul.f32 %v1304, %v1476
        %v1526 = vmul.f32 %v1306, %v1476
        %v1527 = vmul.f32 %v1308, %v1477
        %v1528 = vmul.f32 %v1310, %v1477
        %v1529 = vmul.f32 %v1312, %v1478
        %v1530 = vmul.f32 %v1314, %v1478
        %v1531 = vmul.f32 %v1316, %v1479
        %v1532 = vmul.f32 %v1318, %v1479
        %v1533 = vmul.f32 %v1320, %v1480
        %v1534 = vmul.f32 %v1322, %v1480
        %v1535 = vmul.f32 %v1324, %v1481
        %v1536 = vmul.f32 %v1326, %v1481
        %v1537 = vmul.f32 %v1328, %v1482
        %v1538 = vmul.f32 %v1330, %v1482
        %v1539 = vmul.f32 %v1332, %v1483
        %v1540 = vmul.f32 %v1334, %v1483
        %v1541 = vmul.f32 %v1336, %v1484
        %v1542 = vmul.f32 %v1338, %v1484
        %v1543 = vmul.f32 %v1340, %v1485
        %v1544 = vmul.f32 %v1342, %v1485
        %v1545 = vmul.f32 %v1344, %v1486
        %v1546 = vmul.f32 %v1346, %v1486
        %v1547 = vmul.f32 %v1348, %v1487
        %v1548 = vmul.f32 %v1350, %v1487
        %v1549 = vmul.f32 %v1352, %v1488
        %v1550 = vmul.f32 %v1354, %v1488
        %v1551 = vmul.f32 %v1356, %v1489
        %v1552 = vmul.f32 %v1358, %v1489
        %v1553 = vmul.f32 %v1360, %v1490
        %v1554 = vmul.f32 %v1362, %v1490
        %v1555 = vpack.c.bf16 %v1493, %v1491
        %v1556 = vpack.c.bf16 %v1494, %v1492
        %v1557 = vpack.c.bf16 %v1497, %v1495
        %v1558 = vpack.c.bf16 %v1498, %v1496
        %v1559 = vpack.c.bf16 %v1501, %v1499
        %v1560 = vpack.c.bf16 %v1502, %v1500
        %v1561 = vpack.c.bf16 %v1505, %v1503
        %v1562 = vpack.c.bf16 %v1506, %v1504
        %v1563 = vpack.c.bf16 %v1509, %v1507
        %v1564 = vpack.c.bf16 %v1510, %v1508
        %v1565 = vpack.c.bf16 %v1513, %v1511
        %v1566 = vpack.c.bf16 %v1514, %v1512
        %v1567 = vpack.c.bf16 %v1517, %v1515
        %v1568 = vpack.c.bf16 %v1518, %v1516
        %v1569 = vpack.c.bf16 %v1521, %v1519
        %v1570 = vpack.c.bf16 %v1522, %v1520
        %v1571 = vpack.c.bf16 %v1525, %v1523
        %v1572 = vpack.c.bf16 %v1526, %v1524
        %v1573 = vpack.c.bf16 %v1529, %v1527
        %v1574 = vpack.c.bf16 %v1530, %v1528
        %v1575 = vpack.c.bf16 %v1533, %v1531
        %v1576 = vpack.c.bf16 %v1534, %v1532
        %v1577 = vpack.c.bf16 %v1537, %v1535
        %v1578 = vpack.c.bf16 %v1538, %v1536
        %v1579 = vpack.c.bf16 %v1541, %v1539
        %v1580 = vpack.c.bf16 %v1542, %v1540
        %v1581 = vpack.c.bf16 %v1545, %v1543
        %v1582 = vpack.c.bf16 %v1546, %v1544
        %v1583 = vpack.c.bf16 %v1549, %v1547
        %v1584 = vpack.c.bf16 %v1550, %v1548
        %v1585 = vpack.c.bf16 %v1553, %v1551
        %v1586 = vpack.c.bf16 %v1554, %v1552
        %v1619 = vunpack.c.l.b16 %v1555
        %v1620 = vunpack.c.l.b16 %v1556
        %v1621 = vunpack.c.h.b16 %v1555
        %v1622 = vunpack.c.h.b16 %v1556
        %v1623 = vunpack.c.l.b16 %v1557
        %v1624 = vunpack.c.l.b16 %v1558
        %v1625 = vunpack.c.h.b16 %v1557
        %v1626 = vunpack.c.h.b16 %v1558
        %v1627 = vunpack.c.l.b16 %v1559
        %v1628 = vunpack.c.l.b16 %v1560
        %v1629 = vunpack.c.h.b16 %v1559
        %v1630 = vunpack.c.h.b16 %v1560
        %v1631 = vunpack.c.l.b16 %v1561
        %v1632 = vunpack.c.l.b16 %v1562
        %v1633 = vunpack.c.h.b16 %v1561
        %v1634 = vunpack.c.h.b16 %v1562
        %v1635 = vunpack.c.l.b16 %v1563
        %v1636 = vunpack.c.l.b16 %v1564
        %v1637 = vunpack.c.h.b16 %v1563
        %v1638 = vunpack.c.h.b16 %v1564
        %v1639 = vunpack.c.l.b16 %v1565
        %v1640 = vunpack.c.l.b16 %v1566
        %v1641 = vunpack.c.h.b16 %v1565
        %v1642 = vunpack.c.h.b16 %v1566
        %v1643 = vunpack.c.l.b16 %v1567
        %v1644 = vunpack.c.l.b16 %v1568
        %v1645 = vunpack.c.h.b16 %v1567
        %v1646 = vunpack.c.h.b16 %v1568
        %v1647 = vunpack.c.l.b16 %v1569
        %v1648 = vunpack.c.l.b16 %v1570
        %v1649 = vunpack.c.h.b16 %v1569
        %v1650 = vunpack.c.h.b16 %v1570
        %v1651 = vunpack.c.l.b16 %v1571
        %v1652 = vunpack.c.l.b16 %v1572
        %v1653 = vunpack.c.h.b16 %v1571
        %v1654 = vunpack.c.h.b16 %v1572
        %v1655 = vunpack.c.l.b16 %v1573
        %v1656 = vunpack.c.l.b16 %v1574
        %v1657 = vunpack.c.h.b16 %v1573
        %v1658 = vunpack.c.h.b16 %v1574
        %v1659 = vunpack.c.l.b16 %v1575
        %v1660 = vunpack.c.l.b16 %v1576
        %v1661 = vunpack.c.h.b16 %v1575
        %v1662 = vunpack.c.h.b16 %v1576
        %v1663 = vunpack.c.l.b16 %v1577
        %v1664 = vunpack.c.l.b16 %v1578
        %v1665 = vunpack.c.h.b16 %v1577
        %v1666 = vunpack.c.h.b16 %v1578
        %v1667 = vunpack.c.l.b16 %v1579
        %v1668 = vunpack.c.l.b16 %v1580
        %v1669 = vunpack.c.h.b16 %v1579
        %v1670 = vunpack.c.h.b16 %v1580
        %v1671 = vunpack.c.l.b16 %v1581
        %v1672 = vunpack.c.l.b16 %v1582
        %v1673 = vunpack.c.h.b16 %v1581
        %v1674 = vunpack.c.h.b16 %v1582
        %v1675 = vunpack.c.l.b16 %v1583
        %v1676 = vunpack.c.l.b16 %v1584
        %v1677 = vunpack.c.h.b16 %v1583
        %v1678 = vunpack.c.h.b16 %v1584
        %v1679 = vunpack.c.l.b16 %v1585
        %v1680 = vunpack.c.l.b16 %v1586
        %v1681 = vunpack.c.h.b16 %v1585
        %v1682 = vunpack.c.h.b16 %v1586
        %v1683 = vpack.c.b16 %v1620, %v1619
        %v1684 = vpack.c.b16 %v1622, %v1621
        %v1685 = vpack.c.b16 %v1624, %v1623
        %v1686 = vpack.c.b16 %v1626, %v1625
        %v1687 = vpack.c.b16 %v1628, %v1627
        %v1688 = vpack.c.b16 %v1630, %v1629
        %v1689 = vpack.c.b16 %v1632, %v1631
        %v1690 = vpack.c.b16 %v1634, %v1633
        %v1691 = vpack.c.b16 %v1636, %v1635
        %v1692 = vpack.c.b16 %v1638, %v1637
        %v1693 = vpack.c.b16 %v1640, %v1639
        %v1694 = vpack.c.b16 %v1642, %v1641
        %v1695 = vpack.c.b16 %v1644, %v1643
        %v1696 = vpack.c.b16 %v1646, %v1645
        %v1697 = vpack.c.b16 %v1648, %v1647
        %v1698 = vpack.c.b16 %v1650, %v1649
        %v1699 = vpack.c.b16 %v1652, %v1651
        %v1700 = vpack.c.b16 %v1654, %v1653
        %v1701 = vpack.c.b16 %v1656, %v1655
        %v1702 = vpack.c.b16 %v1658, %v1657
        %v1703 = vpack.c.b16 %v1660, %v1659
        %v1704 = vpack.c.b16 %v1662, %v1661
        %v1705 = vpack.c.b16 %v1664, %v1663
        %v1706 = vpack.c.b16 %v1666, %v1665
        %v1707 = vpack.c.b16 %v1668, %v1667
        %v1708 = vpack.c.b16 %v1670, %v1669
        %v1709 = vpack.c.b16 %v1672, %v1671
        %v1710 = vpack.c.b16 %v1674, %v1673
        %v1711 = vpack.c.b16 %v1676, %v1675
        %v1712 = vpack.c.b16 %v1678, %v1677
        %v1713 = vpack.c.b16 %v1680, %v1679
        %v1714 = vpack.c.b16 %v1682, %v1681
        %1747 = vst [vmem:[%s405] sm:$0xff] %v1683
        %1748 = vst [vmem:[%s405 + $0x8] sm:$0xff] %v1684
        %1749 = vst [vmem:[%s405 + $0x10] sm:$0xff] %v1685
        %1750 = vst [vmem:[%s405 + $0x18] sm:$0xff] %v1686
        %1751 = vst [vmem:[%s405 + $0x20] sm:$0xff] %v1687
        %1752 = vst [vmem:[%s405 + $0x28] sm:$0xff] %v1688
        %1753 = vst [vmem:[%s405 + $0x30] sm:$0xff] %v1689
        %1754 = vst [vmem:[%s405 + $0x38] sm:$0xff] %v1690
        %1755 = vst [vmem:[%s405 + $0x40] sm:$0xff] %v1691
        %1756 = vst [vmem:[%s405 + $0x48] sm:$0xff] %v1692
        %1757 = vst [vmem:[%s405 + $0x50] sm:$0xff] %v1693
        %1758 = vst [vmem:[%s405 + $0x58] sm:$0xff] %v1694
        %1759 = vst [vmem:[%s405 + $0x60] sm:$0xff] %v1695
        %1760 = vst [vmem:[%s405 + $0x68] sm:$0xff] %v1696
        %1761 = vst [vmem:[%s405 + $0x70] sm:$0xff] %v1697
        %1762 = vst [vmem:[%s405 + $0x78] sm:$0xff] %v1698
        %1763 = vst [vmem:[%s405 + $0x80] sm:$0xff] %v1699
        %1764 = vst [vmem:[%s405 + $0x88] sm:$0xff] %v1700
        %1765 = vst [vmem:[%s405 + $0x90] sm:$0xff] %v1701
        %1766 = vst [vmem:[%s405 + $0x98] sm:$0xff] %v1702
        %1767 = vst [vmem:[%s405 + $0xa0] sm:$0xff] %v1703
        %1768 = vst [vmem:[%s405 + $0xa8] sm:$0xff] %v1704
        %1769 = vst [vmem:[%s405 + $0xb0] sm:$0xff] %v1705
        %1770 = vst [vmem:[%s405 + $0xb8] sm:$0xff] %v1706
        %1771 = vst [vmem:[%s405 + $0xc0] sm:$0xff] %v1707
        %1772 = vst [vmem:[%s405 + $0xc8] sm:$0xff] %v1708
        %1773 = vst [vmem:[%s405 + $0xd0] sm:$0xff] %v1709
        %1774 = vst [vmem:[%s405 + $0xd8] sm:$0xff] %v1710
        %1775 = vst [vmem:[%s405 + $0xe0] sm:$0xff] %v1711
        %1776 = vst [vmem:[%s405 + $0xe8] sm:$0xff] %v1712
        %1777 = vst [vmem:[%s405 + $0xf0] sm:$0xff] %v1713
        %1778 = vst [vmem:[%s405 + $0xf8] sm:$0xff] %v1714
        %v1779 = vld [vmem:[#allocation4] sm:$0xff]
        %v1780 = vld [vmem:[#allocation4 + $0x8] sm:$0xff]
        %v1781 = vld [vmem:[#allocation4 + $0x10] sm:$0xff]
        %v1782 = vld [vmem:[#allocation4 + $0x18] sm:$0xff]
        %v1783 = vld [vmem:[#allocation4 + $0x20] sm:$0xff]
        %v1784 = vld [vmem:[#allocation4 + $0x28] sm:$0xff]
        %v1785 = vld [vmem:[#allocation4 + $0x30] sm:$0xff]
        %v1786 = vld [vmem:[#allocation4 + $0x38] sm:$0xff]
        %v1795 = vunpack.c.l.b16 %v1779
        %v1796 = vunpack.c.h.b16 %v1779
        %v1797 = vunpack.c.l.b16 %v1780
        %v1798 = vunpack.c.h.b16 %v1780
        %v1799 = vunpack.c.l.b16 %v1781
        %v1800 = vunpack.c.h.b16 %v1781
        %v1801 = vunpack.c.l.b16 %v1782
        %v1802 = vunpack.c.h.b16 %v1782
        %v1803 = vunpack.c.l.b16 %v1783
        %v1804 = vunpack.c.h.b16 %v1783
        %v1805 = vunpack.c.l.b16 %v1784
        %v1806 = vunpack.c.h.b16 %v1784
        %v1807 = vunpack.c.l.b16 %v1785
        %v1808 = vunpack.c.h.b16 %v1785
        %v1809 = vunpack.c.l.b16 %v1786
        %v1810 = vunpack.c.h.b16 %v1786
        %v1811 = vpack.c.b16 %v1797, %v1795
        %v1812 = vpack.c.b16 %v1798, %v1796
        %v1813 = vpack.c.b16 %v1801, %v1799
        %v1814 = vpack.c.b16 %v1802, %v1800
        %v1815 = vpack.c.b16 %v1805, %v1803
        %v1816 = vpack.c.b16 %v1806, %v1804
        %v1817 = vpack.c.b16 %v1809, %v1807
        %v1818 = vpack.c.b16 %v1810, %v1808
        %1827 = vmatprep.subr.bf16.mxu0 %v1570
        %1828 = vmatpush1.bf16.xpose.msra.mxu0 %v1569
        %1829 = vmatprep.subr.bf16.mxu0 %v1568
        %1830 = vmatpush1.bf16.xpose.msra.mxu0 %v1567
        %1831 = vmatprep.subr.bf16.mxu0 %v1566
        %1832 = vmatpush1.bf16.xpose.msra.mxu0 %v1565
        %1833 = vmatprep.subr.bf16.mxu0 %v1564
        %1834 = vmatpush1.bf16.xpose.msra.mxu0 %v1563
        %1835 = vmatprep.subr.bf16.mxu0 %v1562
        %1836 = vmatpush1.bf16.xpose.msra.mxu0 %v1561
        %1837 = vmatprep.subr.bf16.mxu0 %v1560
        %1838 = vmatpush1.bf16.xpose.msra.mxu0 %v1559
        %1839 = vmatprep.subr.bf16.mxu0 %v1558
        %1840 = vmatpush1.bf16.xpose.msra.mxu0 %v1557
        %1841 = vmatprep.subr.bf16.mxu0 %v1556
        %1842 = vmatpush1.bf16.xpose.msra.mxu0 %v1555
        %1843 = vmatprep.subr.bf16.mxu0 %v1586
        %1844 = vmatpush2.bf16.xpose.msra.mxu0 %v1585
        %1845 = vmatprep.subr.bf16.mxu0 %v1584
        %1846 = vmatpush2.bf16.xpose.msra.mxu0 %v1583
        %1847 = vmatprep.subr.bf16.mxu0 %v1582
        %1848 = vmatpush2.bf16.xpose.msra.mxu0 %v1581
        %1849 = vmatprep.subr.bf16.mxu0 %v1580
        %1850 = vmatpush2.bf16.xpose.msra.mxu0 %v1579
        %1851 = vmatprep.subr.bf16.mxu0 %v1578
        %1852 = vmatpush2.bf16.xpose.msra.mxu0 %v1577
        %1853 = vmatprep.subr.bf16.mxu0 %v1576
        %1854 = vmatpush2.bf16.xpose.msra.mxu0 %v1575
        %1855 = vmatprep.subr.bf16.mxu0 %v1574
        %1856 = vmatpush2.bf16.xpose.msra.mxu0 %v1573
        %1857 = vmatprep.subr.bf16.mxu0 %v1572
        %1858 = vmatpush2.bf16.xpose.msra.mxu0 %v1571
        %1859 = vmatprep.mubr.bf16.mxu0 %v1812
        %1860 = vmatmul.mubr.bf16.gmra.mxu0 %v1811
        %v1861 = vpop.f32.mrf.mxu0
        %v1862 = vadd.f32 0.0, %v1861
        %v1863 = vpop.f32.mrf.mxu0
        %v1864 = vadd.f32 0.0, %v1863
        %v1865 = vpop.f32.mrf.mxu0
        %v1866 = vadd.f32 0.0, %v1865
        %v1867 = vpop.f32.mrf.mxu0
        %v1868 = vadd.f32 0.0, %v1867
        %1869 = vmatprep.mubr.bf16.mxu0 %v1814
        %1870 = vmatmul.mubr.bf16.gmra.mxu0 %v1813
        %v1871 = vpop.f32.mrf.mxu0
        %v1872 = vadd.f32 0.0, %v1871
        %v1873 = vpop.f32.mrf.mxu0
        %v1874 = vadd.f32 0.0, %v1873
        %v1875 = vpop.f32.mrf.mxu0
        %v1876 = vadd.f32 0.0, %v1875
        %v1877 = vpop.f32.mrf.mxu0
        %v1878 = vadd.f32 0.0, %v1877
        %1879 = vmatprep.mubr.bf16.mxu0 %v1816
        %1880 = vmatmul.mubr.bf16.gmra.mxu0 %v1815
        %v1881 = vpop.f32.mrf.mxu0
        %v1882 = vadd.f32 0.0, %v1881
        %v1883 = vpop.f32.mrf.mxu0
        %v1884 = vadd.f32 0.0, %v1883
        %v1885 = vpop.f32.mrf.mxu0
        %v1886 = vadd.f32 0.0, %v1885
        %v1887 = vpop.f32.mrf.mxu0
        %v1888 = vadd.f32 0.0, %v1887
        %1889 = vmatprep.mubr.bf16.mxu0 %v1818
        %1890 = vmatmul.mubr.bf16.gmra.mxu0 %v1817
        %v1891 = vpop.f32.mrf.mxu0
        %v1892 = vadd.f32 0.0, %v1891
        %v1893 = vpop.f32.mrf.mxu0
        %v1894 = vadd.f32 0.0, %v1893
        %v1895 = vpop.f32.mrf.mxu0
        %v1896 = vadd.f32 0.0, %v1895
        %v1897 = vpop.f32.mrf.mxu0
        %v1898 = vadd.f32 0.0, %v1897
        %1899 = vdwg.mxu0
        %s1900 = smul.addr %s776, 8
        %s1901 = scalar_lea.vmem %s364, %s1900 [#allocation6]
        %v1902 = vld [vmem:[%s1901] sm:$0xff]
        %v1903 = vld [vmem:[%s1901 + $0x8] sm:$0xff]
        %v1904 = vld [vmem:[%s1901 + $0x10] sm:$0xff]
        %v1905 = vld [vmem:[%s1901 + $0x18] sm:$0xff]
        %v1906 = vld [vmem:[%s1901 + $0x20] sm:$0xff]
        %v1907 = vld [vmem:[%s1901 + $0x28] sm:$0xff]
        %v1908 = vld [vmem:[%s1901 + $0x30] sm:$0xff]
        %v1909 = vld [vmem:[%s1901 + $0x38] sm:$0xff]
        %v1910 = vld [vmem:[%s1901 + $0x40] sm:$0xff]
        %v1911 = vld [vmem:[%s1901 + $0x48] sm:$0xff]
        %v1912 = vld [vmem:[%s1901 + $0x50] sm:$0xff]
        %v1913 = vld [vmem:[%s1901 + $0x58] sm:$0xff]
        %v1914 = vld [vmem:[%s1901 + $0x60] sm:$0xff]
        %v1915 = vld [vmem:[%s1901 + $0x68] sm:$0xff]
        %v1916 = vld [vmem:[%s1901 + $0x70] sm:$0xff]
        %v1917 = vld [vmem:[%s1901 + $0x78] sm:$0xff]
        %s1918 = sld [smem:[#allocation5]]
        %v1919 = vstv %s1918
        %v1920 = vmul.f32 %v1919, %v1862
        %v1921 = vmul.f32 %v1919, %v1864
        %v1922 = vmul.f32 %v1919, %v1866
        %v1923 = vmul.f32 %v1919, %v1868
        %v1924 = vmul.f32 %v1919, %v1872
        %v1925 = vmul.f32 %v1919, %v1874
        %v1926 = vmul.f32 %v1919, %v1876
        %v1927 = vmul.f32 %v1919, %v1878
        %v1928 = vmul.f32 %v1919, %v1882
        %v1929 = vmul.f32 %v1919, %v1884
        %v1930 = vmul.f32 %v1919, %v1886
        %v1931 = vmul.f32 %v1919, %v1888
        %v1932 = vmul.f32 %v1919, %v1892
        %v1933 = vmul.f32 %v1919, %v1894
        %v1934 = vmul.f32 %v1919, %v1896
        %v1935 = vmul.f32 %v1919, %v1898
        %v1936 = vadd.f32 %v1920, %v1902
        %v1937 = vadd.f32 %v1921, %v1903
        %v1938 = vadd.f32 %v1922, %v1904
        %v1939 = vadd.f32 %v1923, %v1905
        %v1940 = vadd.f32 %v1924, %v1906
        %v1941 = vadd.f32 %v1925, %v1907
        %v1942 = vadd.f32 %v1926, %v1908
        %v1943 = vadd.f32 %v1927, %v1909
        %v1944 = vadd.f32 %v1928, %v1910
        %v1945 = vadd.f32 %v1929, %v1911
        %v1946 = vadd.f32 %v1930, %v1912
        %v1947 = vadd.f32 %v1931, %v1913
        %v1948 = vadd.f32 %v1932, %v1914
        %v1949 = vadd.f32 %v1933, %v1915
        %v1950 = vadd.f32 %v1934, %v1916
        %v1951 = vadd.f32 %v1935, %v1917
        %1952 = vst [vmem:[%s398] sm:$0xff] %v1936
        %1953 = vst [vmem:[%s398 + $0x8] sm:$0xff] %v1937
        %1954 = vst [vmem:[%s398 + $0x10] sm:$0xff] %v1938
        %1955 = vst [vmem:[%s398 + $0x18] sm:$0xff] %v1939
        %1956 = vst [vmem:[%s398 + $0x20] sm:$0xff] %v1940
        %1957 = vst [vmem:[%s398 + $0x28] sm:$0xff] %v1941
        %1958 = vst [vmem:[%s398 + $0x30] sm:$0xff] %v1942
        %1959 = vst [vmem:[%s398 + $0x38] sm:$0xff] %v1943
        %1960 = vst [vmem:[%s398 + $0x40] sm:$0xff] %v1944
        %1961 = vst [vmem:[%s398 + $0x48] sm:$0xff] %v1945
        %1962 = vst [vmem:[%s398 + $0x50] sm:$0xff] %v1946
        %1963 = vst [vmem:[%s398 + $0x58] sm:$0xff] %v1947
        %1964 = vst [vmem:[%s398 + $0x60] sm:$0xff] %v1948
        %1965 = vst [vmem:[%s398 + $0x68] sm:$0xff] %v1949
        %1966 = vst [vmem:[%s398 + $0x70] sm:$0xff] %v1950
        %1967 = vst [vmem:[%s398 + $0x78] sm:$0xff] %v1951
        %s1968 = sand.u32 %s248, 1
        %s1969 = scalar_lea.sflag [#allocation8], %s1968
        %s1970 = sand.u32 %s248, 1
        %s1971 = smul.addr %s1970, 128
        %s1972 = scalar_lea.vmem [#allocation9], %s1971
        %s1973 = sand.u32 %s276, 1
        %s1974 = scalar_lea.sflag [#allocation11], %s1973
        %s1975 = sand.u32 %s276, 1
        %s1976 = smul.addr %s1975, 256
        %s1977 = scalar_lea.vmem [#allocation10], %s1976
        // Predicated region
        $region65: #{tpu_custom_call.1} parent=55 // pred_check
          %p1978 = pneg %p258
        $region66: #{tpu_custom_call.1} parent=55 // pred_check_branch
          %1980 = sbr.rel (%p1978) target = $region68
        $region67: #{tpu_custom_call.1} parent=55 // pred_region
          %s1981 = smul.u32 2, %s37
          %s1983 = ssub.s32 2048, 2048
          %1984 = vsyncadd %s1969, %s1983
          %s1985 = smul.addr %s36, 16
          %s1986 = sadd.s32 %s1981, %s1985
          %s1987 = smul.addr %s1986, 128
          %s1988 = scalar_lea.hbm %s9, %s1987
          %s1989 = sshll.u32 %s1972, 4
          %s1990 = int_to_ptr.vmem [resolvable:$true] %s1989
          %1995 = dma.vmem_to_hbm [thread:$0]  %s1990, 2048, %s1988, %s1969, 256, 256, 16
        $region68: #{tpu_custom_call.1} parent=55 // pred_fallthru
          _
        // Predicated region
        $region69: #{tpu_custom_call.1} parent=55 // pred_check
          %p1996 = pneg %p286
        $region70: #{tpu_custom_call.1} parent=55 // pred_check_branch
          %1998 = sbr.rel (%p1996) target = $region72
        $region71: #{tpu_custom_call.1} parent=55 // pred_region
          %s1999 = smul.u32 32, %s37
          %s2001 = ssub.s32 4096, 4096
          %2002 = vsyncadd %s1974, %s2001
          %s2003 = smul.addr %s1999, 2
          %s2004 = smul.addr %s36, 64
          %s2005 = sadd.s32 %s2003, %s2004
          %s2006 = smul.addr %s2005, 64
          %s2007 = scalar_lea.hbm %s10, %s2006
          %s2008 = sshll.u32 %s1977, 4
          %s2009 = int_to_ptr.vmem [resolvable:$true] %s2008
          %2014 = dma.vmem_to_hbm [thread:$0]  %s2009, 4096, %s2007, %s1974, 128, 128, 8
        $region72: #{tpu_custom_call.1} parent=55 // pred_fallthru
          _
      $region56: #{tpu_custom_call.1} parent=5 // pred_fallthru
        _
      %p2015 = scmp.le.s32.totalorder 2, %s27
      // Predicated region
      $region73: #{tpu_custom_call.1} parent=5 // pred_check
        %p2016 = pneg %p2015
      $region74: #{tpu_custom_call.1} parent=5 // pred_check_branch
        %2018 = sbr.rel (%p2016) target = $region76
      $region75: #{tpu_custom_call.1} parent=5 // pred_region
        %s2019 = ssub.s32 %s27, 2
        // Predicated region
        $region77: #{tpu_custom_call.1} parent=75 // pred_check
          %p2020 = pneg %p264
        $region78: #{tpu_custom_call.1} parent=75 // pred_check_branch
          %2022 = sbr.rel (%p2020) target = $region80
        $region79: #{tpu_custom_call.1} parent=75 // pred_region
          %s2023 = sand.u32 %s249, 1
          %s2024 = scalar_lea.sflag [#allocation8], %s2023
          %s2025 = sand.u32 %s249, 1
          %s2026 = smul.addr %s2025, 128
          %s2027 = scalar_lea.vmem [#allocation9], %s2026
          %2028 = dma.done %s2024, 2048
        $region80: #{tpu_custom_call.1} parent=75 // pred_fallthru
          _
        // Predicated region
        $region81: #{tpu_custom_call.1} parent=75 // pred_check
          %p2029 = pneg %p292
        $region82: #{tpu_custom_call.1} parent=75 // pred_check_branch
          %2031 = sbr.rel (%p2029) target = $region84
        $region83: #{tpu_custom_call.1} parent=75 // pred_region
          %s2032 = sand.u32 %s277, 1
          %s2033 = scalar_lea.sflag [#allocation11], %s2032
          %s2034 = sand.u32 %s277, 1
          %s2035 = smul.addr %s2034, 256
          %s2036 = scalar_lea.vmem [#allocation10], %s2035
          %2037 = dma.done %s2033, 4096
        $region84: #{tpu_custom_call.1} parent=75 // pred_fallthru
          _
      $region76: #{tpu_custom_call.1} parent=5 // pred_fallthru
        _
    $region6: #{tpu_custom_call.1} parent=1 // loop_footer
      %s31 = sadd.s32 1, %s27
    $region7: #{tpu_custom_call.1} parent=1 // loop_footer_branch
      %26 = sbr.rel target = $region3
    $region8: #{tpu_custom_call.1} parent=1 // loop_exit
      _
    %2038 = vsyncpa [#allocation7], 1
    %s2039 = scalar_lea.sflag [#allocation7], 1
    %2040 = vsyncpa %s2039, 1
    %2041 = vsyncpa [#allocation8], 1
    %s2042 = scalar_lea.sflag [#allocation8], 1
    %2043 = vsyncpa %s2042, 1
    %2044 = vsyncpa [#allocation11], 1
    %s2045 = scalar_lea.sflag [#allocation11], 1
    %2046 = vsyncpa %s2045, 1

</llo_original>
